<compile_context>
chip_gen: v6e
topology: v6e:2x2x1
jax: 0.10.0
libtpu: 0.0.40
codegen_flags: <defaults>
</compile_context>

<pallas_src>
import jax
import jax.numpy as jnp
from jax.experimental import pallas as pl
from jax.experimental.pallas import tpu as pltpu

# ----- small LMDA hyper-parameters (consistent with the module structure) -----
B = 2
CHANS = 16        # EEG channels ("chans")
SAMPLES = 128     # time samples
DEPTH = 4         # depth of channel_weight
KERNEL = 15       # temporal depthwise kernel length
CD1 = 8           # channel_depth1
CD2 = 4           # channel_depth2
AVEPOOL = 4
NUM_CLASSES = 4
ATT_K = 7         # EEGDepthAttention conv kernel size
BN_EPS = 1e-5

W_OUT = SAMPLES - KERNEL + 1      # 114: width after the (1, KERNEL) valid conv
W_POOL = W_OUT // AVEPOOL         # 28 : width after AvgPool3d((1, 1, AVEPOOL))
W_PAD = 128                       # W_OUT zero-padded to one full lane tile
BN_ROWS = B * CHANS               # 32 : batch folded onto the sublane axis

# slab (BN_ROWS, 128) f32 layout for the small folded constants
_SL_M = 0                         # m_cols    : (32, CD1)   cols [0, 8)
_SL_AMAT = 8                      # amat/CHANS: (CD1, CD1)  rows [0,8) cols [8,16)
_SL_B2 = 16                       # bias2     : (CD1,)      col 16
_SL_B34 = 17                      # bias34    : (CD2,)      col 17
_SL_B5 = 24                       # b5        : (NUM_CLASSES,) row 0, cols [24,28)


def _gelu_tanh(v):
    # tanh-approx GELU: transcendental goes to the (otherwise idle) EUP slot.
    # TODO(synk): switch back to exact-erf GELU if bitwise parity with the
    # nn.GELU() default is required.
    c = 0.7978845608028654  # sqrt(2/pi)
    return 0.5 * v * (1.0 + jnp.tanh(c * (v + 0.044715 * v * v * v)))


def lmda_kernel(x_ref, toep_ref, a3_ref, w5r_ref, slab_ref, out_ref):
    f32 = jnp.float32
    xb = x_ref[...].astype(jnp.bfloat16)                    # (32, 128) shared MXU LHS
    slab = slab_ref[...]                                    # (32, 128) f32
    amat = slab[0:CD1, _SL_AMAT:_SL_AMAT + CD1]             # (8, 8)  (1/CHANS folded in)
    bias34 = slab[0:CD2, _SL_B34:_SL_B34 + 1]               # (4, 1)
    b5_row = slab[0:1, _SL_B5:_SL_B5 + NUM_CLASSES]         # (1, 4)

    # ---- stage 1: channel_weight einsum + 1x1 time conv + BN1 folded into the
    #      per-row scale m (applied AFTER the matmul); depthwise (1,KERNEL)
    #      conv + BN2 folded into per-depth bf16 Toeplitz bands; then GELU. ----
    x_time = []
    xp_rows = []
    for o in range(CD1):
        z = jnp.dot(xb, toep_ref[o], preferred_element_type=f32)   # (32, 128)
        m_col = slab[:, o:o + 1]                                   # (32, 1)
        b2 = slab[o:o + 1, _SL_B2:_SL_B2 + 1]                      # (1, 1)
        xt = _gelu_tanh(m_col * z + b2)                            # (32, 128) f32
        x_time.append(xt)
        # per-batch channel sums (1/CHANS of the mean is folded into amat);
        # batches placed side by side on the lane axis.
        xp0 = jnp.sum(xt[0:CHANS, :], axis=0, keepdims=True)       # (1, 128)
        xp1 = jnp.sum(xt[CHANS:2 * CHANS, :], axis=0, keepdims=True)
        xp_rows.append(jnp.concatenate([xp0, xp1], axis=1))        # (1, 256)

    # ---- stage 2: EEGDepthAttention, both batches fused (N = 256 lanes) ----
    xp = jnp.concatenate(xp_rows, axis=0)                          # (8, 256)
    logit = jnp.dot(amat, xp, preferred_element_type=f32)          # (8, 256)
    logit = logit - jnp.max(logit, axis=0, keepdims=True)
    e = jnp.exp(logit)
    inv = pl.reciprocal(jnp.sum(e, axis=0, keepdims=True), approx=True)
    att = e * inv                                                  # softmax over depth

    # Build x_att with depth*chans stacked on sublanes (K = 128) and batches on
    # the lane axis (N = 256).  The *CD1 rescale is folded into a3.
    xa_rows = []
    for o in range(CD1):
        xt = x_time[o]
        a0 = att[o:o + 1, 0:W_PAD]                                 # (1, 128)
        a1 = att[o:o + 1, W_PAD:2 * W_PAD]                         # (1, 128)
        xa0 = xt[0:CHANS, :] * a0                                  # (16, 128)
        xa1 = xt[CHANS:2 * CHANS, :] * a1                          # (16, 128)
        xa_rows.append(jnp.concatenate([xa0, xa1], axis=1))        # (16, 256)
    x_att = jnp.concatenate(xa_rows, axis=0)                       # (128, 256)

    # ---- stage 3: chanel_conv (1x1 CD1->CD2 + BN3 + depthwise (CHANS,1) + BN4)
    #      as ONE K=128 contraction for both batches, then GELU. ----
    y3 = jnp.dot(a3_ref[...], x_att, preferred_element_type=f32) + bias34   # (4, 256)
    gy3 = _gelu_tanh(y3)

    # ---- stage 4: AvgPool folded into w5r (its pad lanes are zero) + Linear ----
    g = jnp.stack([gy3[:, 0:W_PAD], gy3[:, W_PAD:2 * W_PAD]], axis=0)       # (2, 4, 128)
    prod = g[:, None, :, :] * w5r_ref[...][None, :, :, :]                   # (2, 4, 4, 128)
    cls = jnp.sum(jnp.sum(prod, axis=-1), axis=-1) + b5_row                 # (2, 4)
    out_ref[...] = cls.astype(out_ref.dtype)


def lmda_forward(x, packed):
    toep, a3_2d, w5r, slab = packed
    x_flat = x.astype(jnp.float32).reshape(B * CHANS, SAMPLES)
    return pl.pallas_call(
        lmda_kernel,
        out_shape=jax.ShapeDtypeStruct((B, NUM_CLASSES), jnp.float32),
        in_specs=[pl.BlockSpec(memory_space=pltpu.MemorySpace.VMEM)] * 5,
        out_specs=pl.BlockSpec(memory_space=pltpu.MemorySpace.VMEM),
    )(x_flat, toep, a3_2d, w5r, slab)


def init_params(key):
    """Raw (PyTorch-layout) parameters; BN is eval-mode scale/shift."""
    ks = jax.random.split(key, 12)

    def bn(k, c):
        gamma = 1.0 + 0.1 * jax.random.normal(k, (c,), jnp.float32)
        beta = 0.1 * jax.random.normal(jax.random.fold_in(k, 1), (c,), jnp.float32)
        scale = gamma / jnp.sqrt(1.0 + BN_EPS)   # running_mean=0, running_var=1
        shift = beta
        return scale, shift

    cw = jax.random.normal(ks[0], (DEPTH, CHANS), jnp.float32) * (6.0 / (DEPTH + CHANS)) ** 0.5
    w1 = jax.random.normal(ks[1], (CD1, DEPTH), jnp.float32) * 0.3
    s1, h1 = bn(ks[2], CD1)
    w2 = jax.random.normal(ks[3], (CD1, KERNEL), jnp.float32) * 0.2
    s2, h2 = bn(ks[4], CD1)
    wd = jax.random.normal(ks[5], (ATT_K,), jnp.float32) * 0.4   # depth-attention taps
    w3 = jax.random.normal(ks[6], (CD2, CD1), jnp.float32) * 0.3
    s3, h3 = bn(ks[7], CD2)
    w4 = jax.random.normal(ks[8], (CD2, CHANS), jnp.float32) * 0.3
    s4, h4 = bn(ks[9], CD2)
    w5 = jax.random.normal(ks[10], (CD2, W_POOL, NUM_CLASSES), jnp.float32) * 0.1
    b5 = 0.01 * jax.random.normal(ks[11], (NUM_CLASSES,), jnp.float32)
    return (cw, w1, s1, h1, w2, s2, h2, wd, w3, s3, h3, w4, s4, h4, w5, b5)


def pack_params(params):
    """All parameter-only math hoisted out of the kernel (done once per model)."""
    (cw, w1, s1, h1, w2, s2, h2, wd, w3, s3, h3, w4, s4, h4, w5, b5) = params

    # channel_weight einsum + 1x1 time_conv + BN1 scale, folded; tiled over batch.
    m_eff = s1[:, None] * jnp.dot(w1, cw)                    # (CD1, CHANS)
    m_cols = jnp.tile(m_eff.T, (B, 1))                       # (B*CHANS, CD1)

    # Depthwise temporal conv with BN2 folded -> per-depth Toeplitz bands,
    # zero-padded on the output-width axis to W_PAD lanes, stored in bf16.
    w2e = s2[:, None] * w2                                   # (CD1, KERNEL)
    s_idx = jnp.arange(SAMPLES)[:, None]
    w_idx = jnp.arange(W_PAD)[None, :]
    tap = s_idx - w_idx                                      # (SAMPLES, W_PAD)
    valid = (tap >= 0) & (tap < KERNEL) & (w_idx < W_OUT)
    toep = jnp.where(valid[None, :, :],
                     w2e[:, jnp.clip(tap, 0, KERNEL - 1)], 0.0)
    toep = toep.astype(jnp.bfloat16)                         # (CD1, SAMPLES, W_PAD)
    bias2 = h1 * jnp.sum(w2e, axis=1) + h2                   # (CD1,)

    # EEGDepthAttention (7,1) conv over depth as a band matrix; 1/CHANS of the
    # adaptive-avg-pool mean is folded in (exact: folded before the softmax).
    ri = jnp.arange(CD1)[:, None]
    cj = jnp.arange(CD1)[None, :]
    atap = cj - ri + ATT_K // 2
    amat = jnp.where((atap >= 0) & (atap < ATT_K),
                     wd[jnp.clip(atap, 0, ATT_K - 1)], 0.0) / CHANS
    # conv bias is nn.init.constant_(0) and cancels in the softmax -> dropped.

    # chanel_conv (1x1 CD1->CD2 + BN3 + depthwise (CHANS,1) + BN4) folded into a
    # single (CD2, CD1*CHANS) contraction matrix; the *CD1 attention rescale is
    # folded in as well (exact, since stage 3 is linear in x_att).
    a3 = jnp.einsum('p,po,pc->opc', s3 * s4, w3, w4)         # (CD1, CD2, CHANS)
    a3_2d = (float(CD1) *
             jnp.transpose(a3, (1, 0, 2)).reshape(CD2, CD1 * CHANS)).astype(jnp.float32)
    bias34 = s4 * h3 * jnp.sum(w4, axis=1) + h4              # (CD2,)

    # AvgPool3d((1,1,AVEPOOL)) folded into the classifier weights; pad width to
    # W_PAD with exact zeros so garbage pad lanes never reach the output.
    pool = jax.nn.one_hot(jnp.arange(W_OUT) // AVEPOOL, W_POOL, dtype=jnp.float32) / AVEPOOL
    pool = pool * (jnp.arange(W_OUT)[:, None] < W_POOL * AVEPOOL)
    w5p = jnp.einsum('vq,pqn->pvn', pool, w5)                # (CD2, W_OUT, NUM_CLASSES)
    w5r = jnp.transpose(w5p, (2, 0, 1))                      # (NUM_CLASSES, CD2, W_OUT)
    w5r = jnp.pad(w5r, ((0, 0), (0, 0), (0, W_PAD - W_OUT))).astype(jnp.float32)

    # Pack the remaining tiny constants into one (32, 128) VMEM slab.
    slab = jnp.zeros((BN_ROWS, 128), jnp.float32)
    slab = slab.at[:, _SL_M:_SL_M + CD1].set(m_cols)
    slab = slab.at[0:CD1, _SL_AMAT:_SL_AMAT + CD1].set(amat.astype(jnp.float32))
    slab = slab.at[0:CD1, _SL_B2].set(bias2)
    slab = slab.at[0:CD2, _SL_B34].set(bias34)
    slab = slab.at[0, _SL_B5:_SL_B5 + NUM_CLASSES].set(b5)
    return (toep, a3_2d, w5r, slab)


if __name__ == "__main__":
    key = jax.random.PRNGKey(0)
    kx, kp = jax.random.split(key)
    x = jax.random.normal(kx, (B, 1, CHANS, SAMPLES), jnp.float32)
    params = init_params(kp)
    packed = pack_params(params)

    out = jax.jit(lmda_forward)(x, packed)
    out = jax.block_until_ready(out)
    assert out.shape == (B, NUM_CLASSES), out.shape
    assert bool(jnp.all(jnp.isfinite(out)))
    print("KERNEL_OK")
</pallas_src>

<mosaic_0001>
module attributes {stable_mosaic.version = 11 : i64} {
  func.func @lmda_kernel(%arg0: memref<32x128xf32, #tpu.memory_space<vmem>>, %arg1: memref<8x128x128xbf16, #tpu.memory_space<vmem>>, %arg2: memref<4x128xf32, #tpu.memory_space<vmem>>, %arg3: memref<4x4x128xf32, #tpu.memory_space<vmem>>, %arg4: memref<32x128xf32, #tpu.memory_space<vmem>>, %arg5: memref<2x4xf32, #tpu.memory_space<vmem>>) attributes {dimension_semantics = [], scalar_prefetch = 0 : i64, scratch_operands = 0 : i64, tpu.core_type = #tpu.core_type<tc>} {
    %c0 = arith.constant 0 : index
    %c0_0 = arith.constant 0 : index
    %0 = vector.load %arg0[%c0, %c0_0] : memref<32x128xf32, #tpu.memory_space<vmem>>, vector<32x128xf32>
    %1 = arith.truncf %0 : vector<32x128xf32> to vector<32x128xbf16>
    %c0_1 = arith.constant 0 : index
    %c0_2 = arith.constant 0 : index
    %2 = vector.load %arg4[%c0_1, %c0_2] : memref<32x128xf32, #tpu.memory_space<vmem>>, vector<32x128xf32>
    %3 = vector.extract_strided_slice %2 {offsets = [0, 8], sizes = [8, 8], strides = [1, 1]} : vector<32x128xf32> to vector<8x8xf32>
    %4 = vector.extract_strided_slice %2 {offsets = [0, 17], sizes = [4, 1], strides = [1, 1]} : vector<32x128xf32> to vector<4x1xf32>
    %5 = vector.extract_strided_slice %2 {offsets = [0, 24], sizes = [1, 4], strides = [1, 1]} : vector<32x128xf32> to vector<1x4xf32>
    %c0_3 = arith.constant 0 : index
    %c0_4 = arith.constant 0 : index
    %c0_5 = arith.constant 0 : index
    %6 = vector.load %arg1[%c0_3, %c0_4, %c0_5] : memref<8x128x128xbf16, #tpu.memory_space<vmem>>, vector<1x128x128xbf16>
    %7 = vector.shape_cast %6 : vector<1x128x128xbf16> to vector<128x128xbf16>
    %cst = arith.constant dense<0.000000e+00> : vector<32x128xf32>
    %8 = tpu.matmul %1, %7, %cst {dimension_numbers = #tpu.dot_dimension_numbers<[1], [0], [0], [1], [0, 0, 1, 1], [], []>} : vector<32x128xbf16>, vector<128x128xbf16>, vector<32x128xf32> -> vector<32x128xf32>
    %9 = vector.extract_strided_slice %2 {offsets = [0, 0], sizes = [32, 1], strides = [1, 1]} : vector<32x128xf32> to vector<32x1xf32>
    %10 = vector.extract_strided_slice %2 {offsets = [0, 16], sizes = [1, 1], strides = [1, 1]} : vector<32x128xf32> to vector<1x1xf32>
    %11 = vector.broadcast %9 : vector<32x1xf32> to vector<32x128xf32>
    %12 = arith.mulf %11, %8 : vector<32x128xf32>
    %13 = vector.broadcast %10 : vector<1x1xf32> to vector<32x128xf32>
    %14 = arith.addf %12, %13 : vector<32x128xf32>
    %cst_6 = arith.constant 5.000000e-01 : f32
    %15 = vector.broadcast %cst_6 : f32 to vector<32x128xf32>
    %16 = arith.mulf %15, %14 : vector<32x128xf32>
    %cst_7 = arith.constant 4.471500e-02 : f32
    %17 = vector.broadcast %cst_7 : f32 to vector<32x128xf32>
    %18 = arith.mulf %17, %14 : vector<32x128xf32>
    %19 = arith.mulf %18, %14 : vector<32x128xf32>
    %20 = arith.mulf %19, %14 : vector<32x128xf32>
    %21 = arith.addf %14, %20 : vector<32x128xf32>
    %cst_8 = arith.constant 0.797884583 : f32
    %22 = vector.broadcast %cst_8 : f32 to vector<32x128xf32>
    %23 = arith.mulf %22, %21 : vector<32x128xf32>
    %24 = math.tanh %23 : vector<32x128xf32>
    %cst_9 = arith.constant 1.000000e+00 : f32
    %25 = vector.broadcast %cst_9 : f32 to vector<32x128xf32>
    %26 = arith.addf %25, %24 : vector<32x128xf32>
    %27 = arith.mulf %16, %26 : vector<32x128xf32>
    %28 = vector.extract_strided_slice %27 {offsets = [0, 0], sizes = [16, 128], strides = [1, 1]} : vector<32x128xf32> to vector<16x128xf32>
    %cst_10 = arith.constant dense<0.000000e+00> : vector<128xf32>
    %29 = vector.multi_reduction <add>, %28, %cst_10 [0] : vector<16x128xf32> to vector<128xf32>
    %30 = vector.shape_cast %29 : vector<128xf32> to vector<1x128xf32>
    %31 = vector.extract_strided_slice %27 {offsets = [16, 0], sizes = [16, 128], strides = [1, 1]} : vector<32x128xf32> to vector<16x128xf32>
    %cst_11 = arith.constant dense<0.000000e+00> : vector<128xf32>
    %32 = vector.multi_reduction <add>, %31, %cst_11 [0] : vector<16x128xf32> to vector<128xf32>
    %33 = vector.shape_cast %32 : vector<128xf32> to vector<1x128xf32>
    %34 = tpu.concatenate %30, %33 in 1 : vector<1x128xf32>, vector<1x128xf32> -> vector<1x256xf32>
    %c1 = arith.constant 1 : index
    %c0_12 = arith.constant 0 : index
    %c0_13 = arith.constant 0 : index
    %35 = vector.load %arg1[%c1, %c0_12, %c0_13] : memref<8x128x128xbf16, #tpu.memory_space<vmem>>, vector<1x128x128xbf16>
    %36 = vector.shape_cast %35 : vector<1x128x128xbf16> to vector<128x128xbf16>
    %cst_14 = arith.constant dense<0.000000e+00> : vector<32x128xf32>
    %37 = tpu.matmul %1, %36, %cst_14 {dimension_numbers = #tpu.dot_dimension_numbers<[1], [0], [0], [1], [0, 0, 1, 1], [], []>} : vector<32x128xbf16>, vector<128x128xbf16>, vector<32x128xf32> -> vector<32x128xf32>
    %38 = vector.extract_strided_slice %2 {offsets = [0, 1], sizes = [32, 1], strides = [1, 1]} : vector<32x128xf32> to vector<32x1xf32>
    %39 = vector.extract_strided_slice %2 {offsets = [1, 16], sizes = [1, 1], strides = [1, 1]} : vector<32x128xf32> to vector<1x1xf32>
    %40 = vector.broadcast %38 : vector<32x1xf32> to vector<32x128xf32>
    %41 = arith.mulf %40, %37 : vector<32x128xf32>
    %42 = vector.broadcast %39 : vector<1x1xf32> to vector<32x128xf32>
    %43 = arith.addf %41, %42 : vector<32x128xf32>
    %cst_15 = arith.constant 5.000000e-01 : f32
    %44 = vector.broadcast %cst_15 : f32 to vector<32x128xf32>
    %45 = arith.mulf %44, %43 : vector<32x128xf32>
    %cst_16 = arith.constant 4.471500e-02 : f32
    %46 = vector.broadcast %cst_16 : f32 to vector<32x128xf32>
    %47 = arith.mulf %46, %43 : vector<32x128xf32>
    %48 = arith.mulf %47, %43 : vector<32x128xf32>
    %49 = arith.mulf %48, %43 : vector<32x128xf32>
    %50 = arith.addf %43, %49 : vector<32x128xf32>
    %cst_17 = arith.constant 0.797884583 : f32
    %51 = vector.broadcast %cst_17 : f32 to vector<32x128xf32>
    %52 = arith.mulf %51, %50 : vector<32x128xf32>
    %53 = math.tanh %52 : vector<32x128xf32>
    %cst_18 = arith.constant 1.000000e+00 : f32
    %54 = vector.broadcast %cst_18 : f32 to vector<32x128xf32>
    %55 = arith.addf %54, %53 : vector<32x128xf32>
    %56 = arith.mulf %45, %55 : vector<32x128xf32>
    %57 = vector.extract_strided_slice %56 {offsets = [0, 0], sizes = [16, 128], strides = [1, 1]} : vector<32x128xf32> to vector<16x128xf32>
    %cst_19 = arith.constant dense<0.000000e+00> : vector<128xf32>
    %58 = vector.multi_reduction <add>, %57, %cst_19 [0] : vector<16x128xf32> to vector<128xf32>
    %59 = vector.shape_cast %58 : vector<128xf32> to vector<1x128xf32>
    %60 = vector.extract_strided_slice %56 {offsets = [16, 0], sizes = [16, 128], strides = [1, 1]} : vector<32x128xf32> to vector<16x128xf32>
    %cst_20 = arith.constant dense<0.000000e+00> : vector<128xf32>
    %61 = vector.multi_reduction <add>, %60, %cst_20 [0] : vector<16x128xf32> to vector<128xf32>
    %62 = vector.shape_cast %61 : vector<128xf32> to vector<1x128xf32>
    %63 = tpu.concatenate %59, %62 in 1 : vector<1x128xf32>, vector<1x128xf32> -> vector<1x256xf32>
    %c2 = arith.constant 2 : index
    %c0_21 = arith.constant 0 : index
    %c0_22 = arith.constant 0 : index
    %64 = vector.load %arg1[%c2, %c0_21, %c0_22] : memref<8x128x128xbf16, #tpu.memory_space<vmem>>, vector<1x128x128xbf16>
    %65 = vector.shape_cast %64 : vector<1x128x128xbf16> to vector<128x128xbf16>
    %cst_23 = arith.constant dense<0.000000e+00> : vector<32x128xf32>
    %66 = tpu.matmul %1, %65, %cst_23 {dimension_numbers = #tpu.dot_dimension_numbers<[1], [0], [0], [1], [0, 0, 1, 1], [], []>} : vector<32x128xbf16>, vector<128x128xbf16>, vector<32x128xf32> -> vector<32x128xf32>
    %67 = vector.extract_strided_slice %2 {offsets = [0, 2], sizes = [32, 1], strides = [1, 1]} : vector<32x128xf32> to vector<32x1xf32>
    %68 = vector.extract_strided_slice %2 {offsets = [2, 16], sizes = [1, 1], strides = [1, 1]} : vector<32x128xf32> to vector<1x1xf32>
    %69 = vector.broadcast %67 : vector<32x1xf32> to vector<32x128xf32>
    %70 = arith.mulf %69, %66 : vector<32x128xf32>
    %71 = vector.broadcast %68 : vector<1x1xf32> to vector<32x128xf32>
    %72 = arith.addf %70, %71 : vector<32x128xf32>
    %cst_24 = arith.constant 5.000000e-01 : f32
    %73 = vector.broadcast %cst_24 : f32 to vector<32x128xf32>
    %74 = arith.mulf %73, %72 : vector<32x128xf32>
    %cst_25 = arith.constant 4.471500e-02 : f32
    %75 = vector.broadcast %cst_25 : f32 to vector<32x128xf32>
    %76 = arith.mulf %75, %72 : vector<32x128xf32>
    %77 = arith.mulf %76, %72 : vector<32x128xf32>
    %78 = arith.mulf %77, %72 : vector<32x128xf32>
    %79 = arith.addf %72, %78 : vector<32x128xf32>
    %cst_26 = arith.constant 0.797884583 : f32
    %80 = vector.broadcast %cst_26 : f32 to vector<32x128xf32>
    %81 = arith.mulf %80, %79 : vector<32x128xf32>
    %82 = math.tanh %81 : vector<32x128xf32>
    %cst_27 = arith.constant 1.000000e+00 : f32
    %83 = vector.broadcast %cst_27 : f32 to vector<32x128xf32>
    %84 = arith.addf %83, %82 : vector<32x128xf32>
    %85 = arith.mulf %74, %84 : vector<32x128xf32>
    %86 = vector.extract_strided_slice %85 {offsets = [0, 0], sizes = [16, 128], strides = [1, 1]} : vector<32x128xf32> to vector<16x128xf32>
    %cst_28 = arith.constant dense<0.000000e+00> : vector<128xf32>
    %87 = vector.multi_reduction <add>, %86, %cst_28 [0] : vector<16x128xf32> to vector<128xf32>
    %88 = vector.shape_cast %87 : vector<128xf32> to vector<1x128xf32>
    %89 = vector.extract_strided_slice %85 {offsets = [16, 0], sizes = [16, 128], strides = [1, 1]} : vector<32x128xf32> to vector<16x128xf32>
    %cst_29 = arith.constant dense<0.000000e+00> : vector<128xf32>
    %90 = vector.multi_reduction <add>, %89, %cst_29 [0] : vector<16x128xf32> to vector<128xf32>
    %91 = vector.shape_cast %90 : vector<128xf32> to vector<1x128xf32>
    %92 = tpu.concatenate %88, %91 in 1 : vector<1x128xf32>, vector<1x128xf32> -> vector<1x256xf32>
    %c3 = arith.constant 3 : index
    %c0_30 = arith.constant 0 : index
    %c0_31 = arith.constant 0 : index
    %93 = vector.load %arg1[%c3, %c0_30, %c0_31] : memref<8x128x128xbf16, #tpu.memory_space<vmem>>, vector<1x128x128xbf16>
    %94 = vector.shape_cast %93 : vector<1x128x128xbf16> to vector<128x128xbf16>
    %cst_32 = arith.constant dense<0.000000e+00> : vector<32x128xf32>
    %95 = tpu.matmul %1, %94, %cst_32 {dimension_numbers = #tpu.dot_dimension_numbers<[1], [0], [0], [1], [0, 0, 1, 1], [], []>} : vector<32x128xbf16>, vector<128x128xbf16>, vector<32x128xf32> -> vector<32x128xf32>
    %96 = vector.extract_strided_slice %2 {offsets = [0, 3], sizes = [32, 1], strides = [1, 1]} : vector<32x128xf32> to vector<32x1xf32>
    %97 = vector.extract_strided_slice %2 {offsets = [3, 16], sizes = [1, 1], strides = [1, 1]} : vector<32x128xf32> to vector<1x1xf32>
    %98 = vector.broadcast %96 : vector<32x1xf32> to vector<32x128xf32>
    %99 = arith.mulf %98, %95 : vector<32x128xf32>
    %100 = vector.broadcast %97 : vector<1x1xf32> to vector<32x128xf32>
    %101 = arith.addf %99, %100 : vector<32x128xf32>
    %cst_33 = arith.constant 5.000000e-01 : f32
    %102 = vector.broadcast %cst_33 : f32 to vector<32x128xf32>
    %103 = arith.mulf %102, %101 : vector<32x128xf32>
    %cst_34 = arith.constant 4.471500e-02 : f32
    %104 = vector.broadcast %cst_34 : f32 to vector<32x128xf32>
    %105 = arith.mulf %104, %101 : vector<32x128xf32>
    %106 = arith.mulf %105, %101 : vector<32x128xf32>
    %107 = arith.mulf %106, %101 : vector<32x128xf32>
    %108 = arith.addf %101, %107 : vector<32x128xf32>
    %cst_35 = arith.constant 0.797884583 : f32
    %109 = vector.broadcast %cst_35 : f32 to vector<32x128xf32>
    %110 = arith.mulf %109, %108 : vector<32x128xf32>
    %111 = math.tanh %110 : vector<32x128xf32>
    %cst_36 = arith.constant 1.000000e+00 : f32
    %112 = vector.broadcast %cst_36 : f32 to vector<32x128xf32>
    %113 = arith.addf %112, %111 : vector<32x128xf32>
    %114 = arith.mulf %103, %113 : vector<32x128xf32>
    %115 = vector.extract_strided_slice %114 {offsets = [0, 0], sizes = [16, 128], strides = [1, 1]} : vector<32x128xf32> to vector<16x128xf32>
    %cst_37 = arith.constant dense<0.000000e+00> : vector<128xf32>
    %116 = vector.multi_reduction <add>, %115, %cst_37 [0] : vector<16x128xf32> to vector<128xf32>
    %117 = vector.shape_cast %116 : vector<128xf32> to vector<1x128xf32>
    %118 = vector.extract_strided_slice %114 {offsets = [16, 0], sizes = [16, 128], strides = [1, 1]} : vector<32x128xf32> to vector<16x128xf32>
    %cst_38 = arith.constant dense<0.000000e+00> : vector<128xf32>
    %119 = vector.multi_reduction <add>, %118, %cst_38 [0] : vector<16x128xf32> to vector<128xf32>
    %120 = vector.shape_cast %119 : vector<128xf32> to vector<1x128xf32>
    %121 = tpu.concatenate %117, %120 in 1 : vector<1x128xf32>, vector<1x128xf32> -> vector<1x256xf32>
    %c4 = arith.constant 4 : index
    %c0_39 = arith.constant 0 : index
    %c0_40 = arith.constant 0 : index
    %122 = vector.load %arg1[%c4, %c0_39, %c0_40] : memref<8x128x128xbf16, #tpu.memory_space<vmem>>, vector<1x128x128xbf16>
    %123 = vector.shape_cast %122 : vector<1x128x128xbf16> to vector<128x128xbf16>
    %cst_41 = arith.constant dense<0.000000e+00> : vector<32x128xf32>
    %124 = tpu.matmul %1, %123, %cst_41 {dimension_numbers = #tpu.dot_dimension_numbers<[1], [0], [0], [1], [0, 0, 1, 1], [], []>} : vector<32x128xbf16>, vector<128x128xbf16>, vector<32x128xf32> -> vector<32x128xf32>
    %125 = vector.extract_strided_slice %2 {offsets = [0, 4], sizes = [32, 1], strides = [1, 1]} : vector<32x128xf32> to vector<32x1xf32>
    %126 = vector.extract_strided_slice %2 {offsets = [4, 16], sizes = [1, 1], strides = [1, 1]} : vector<32x128xf32> to vector<1x1xf32>
    %127 = vector.broadcast %125 : vector<32x1xf32> to vector<32x128xf32>
    %128 = arith.mulf %127, %124 : vector<32x128xf32>
    %129 = vector.broadcast %126 : vector<1x1xf32> to vector<32x128xf32>
    %130 = arith.addf %128, %129 : vector<32x128xf32>
    %cst_42 = arith.constant 5.000000e-01 : f32
    %131 = vector.broadcast %cst_42 : f32 to vector<32x128xf32>
    %132 = arith.mulf %131, %130 : vector<32x128xf32>
    %cst_43 = arith.constant 4.471500e-02 : f32
    %133 = vector.broadcast %cst_43 : f32 to vector<32x128xf32>
    %134 = arith.mulf %133, %130 : vector<32x128xf32>
    %135 = arith.mulf %134, %130 : vector<32x128xf32>
    %136 = arith.mulf %135, %130 : vector<32x128xf32>
    %137 = arith.addf %130, %136 : vector<32x128xf32>
    %cst_44 = arith.constant 0.797884583 : f32
    %138 = vector.broadcast %cst_44 : f32 to vector<32x128xf32>
    %139 = arith.mulf %138, %137 : vector<32x128xf32>
    %140 = math.tanh %139 : vector<32x128xf32>
    %cst_45 = arith.constant 1.000000e+00 : f32
    %141 = vector.broadcast %cst_45 : f32 to vector<32x128xf32>
    %142 = arith.addf %141, %140 : vector<32x128xf32>
    %143 = arith.mulf %132, %142 : vector<32x128xf32>
    %144 = vector.extract_strided_slice %143 {offsets = [0, 0], sizes = [16, 128], strides = [1, 1]} : vector<32x128xf32> to vector<16x128xf32>
    %cst_46 = arith.constant dense<0.000000e+00> : vector<128xf32>
    %145 = vector.multi_reduction <add>, %144, %cst_46 [0] : vector<16x128xf32> to vector<128xf32>
    %146 = vector.shape_cast %145 : vector<128xf32> to vector<1x128xf32>
    %147 = vector.extract_strided_slice %143 {offsets = [16, 0], sizes = [16, 128], strides = [1, 1]} : vector<32x128xf32> to vector<16x128xf32>
    %cst_47 = arith.constant dense<0.000000e+00> : vector<128xf32>
    %148 = vector.multi_reduction <add>, %147, %cst_47 [0] : vector<16x128xf32> to vector<128xf32>
    %149 = vector.shape_cast %148 : vector<128xf32> to vector<1x128xf32>
    %150 = tpu.concatenate %146, %149 in 1 : vector<1x128xf32>, vector<1x128xf32> -> vector<1x256xf32>
    %c5 = arith.constant 5 : index
    %c0_48 = arith.constant 0 : index
    %c0_49 = arith.constant 0 : index
    %151 = vector.load %arg1[%c5, %c0_48, %c0_49] : memref<8x128x128xbf16, #tpu.memory_space<vmem>>, vector<1x128x128xbf16>
    %152 = vector.shape_cast %151 : vector<1x128x128xbf16> to vector<128x128xbf16>
    %cst_50 = arith.constant dense<0.000000e+00> : vector<32x128xf32>
    %153 = tpu.matmul %1, %152, %cst_50 {dimension_numbers = #tpu.dot_dimension_numbers<[1], [0], [0], [1], [0, 0, 1, 1], [], []>} : vector<32x128xbf16>, vector<128x128xbf16>, vector<32x128xf32> -> vector<32x128xf32>
    %154 = vector.extract_strided_slice %2 {offsets = [0, 5], sizes = [32, 1], strides = [1, 1]} : vector<32x128xf32> to vector<32x1xf32>
    %155 = vector.extract_strided_slice %2 {offsets = [5, 16], sizes = [1, 1], strides = [1, 1]} : vector<32x128xf32> to vector<1x1xf32>
    %156 = vector.broadcast %154 : vector<32x1xf32> to vector<32x128xf32>
    %157 = arith.mulf %156, %153 : vector<32x128xf32>
    %158 = vector.broadcast %155 : vector<1x1xf32> to vector<32x128xf32>
    %159 = arith.addf %157, %158 : vector<32x128xf32>
    %cst_51 = arith.constant 5.000000e-01 : f32
    %160 = vector.broadcast %cst_51 : f32 to vector<32x128xf32>
    %161 = arith.mulf %160, %159 : vector<32x128xf32>
    %cst_52 = arith.constant 4.471500e-02 : f32
    %162 = vector.broadcast %cst_52 : f32 to vector<32x128xf32>
    %163 = arith.mulf %162, %159 : vector<32x128xf32>
    %164 = arith.mulf %163, %159 : vector<32x128xf32>
    %165 = arith.mulf %164, %159 : vector<32x128xf32>
    %166 = arith.addf %159, %165 : vector<32x128xf32>
    %cst_53 = arith.constant 0.797884583 : f32
    %167 = vector.broadcast %cst_53 : f32 to vector<32x128xf32>
    %168 = arith.mulf %167, %166 : vector<32x128xf32>
    %169 = math.tanh %168 : vector<32x128xf32>
    %cst_54 = arith.constant 1.000000e+00 : f32
    %170 = vector.broadcast %cst_54 : f32 to vector<32x128xf32>
    %171 = arith.addf %170, %169 : vector<32x128xf32>
    %172 = arith.mulf %161, %171 : vector<32x128xf32>
    %173 = vector.extract_strided_slice %172 {offsets = [0, 0], sizes = [16, 128], strides = [1, 1]} : vector<32x128xf32> to vector<16x128xf32>
    %cst_55 = arith.constant dense<0.000000e+00> : vector<128xf32>
    %174 = vector.multi_reduction <add>, %173, %cst_55 [0] : vector<16x128xf32> to vector<128xf32>
    %175 = vector.shape_cast %174 : vector<128xf32> to vector<1x128xf32>
    %176 = vector.extract_strided_slice %172 {offsets = [16, 0], sizes = [16, 128], strides = [1, 1]} : vector<32x128xf32> to vector<16x128xf32>
    %cst_56 = arith.constant dense<0.000000e+00> : vector<128xf32>
    %177 = vector.multi_reduction <add>, %176, %cst_56 [0] : vector<16x128xf32> to vector<128xf32>
    %178 = vector.shape_cast %177 : vector<128xf32> to vector<1x128xf32>
    %179 = tpu.concatenate %175, %178 in 1 : vector<1x128xf32>, vector<1x128xf32> -> vector<1x256xf32>
    %c6 = arith.constant 6 : index
    %c0_57 = arith.constant 0 : index
    %c0_58 = arith.constant 0 : index
    %180 = vector.load %arg1[%c6, %c0_57, %c0_58] : memref<8x128x128xbf16, #tpu.memory_space<vmem>>, vector<1x128x128xbf16>
    %181 = vector.shape_cast %180 : vector<1x128x128xbf16> to vector<128x128xbf16>
    %cst_59 = arith.constant dense<0.000000e+00> : vector<32x128xf32>
    %182 = tpu.matmul %1, %181, %cst_59 {dimension_numbers = #tpu.dot_dimension_numbers<[1], [0], [0], [1], [0, 0, 1, 1], [], []>} : vector<32x128xbf16>, vector<128x128xbf16>, vector<32x128xf32> -> vector<32x128xf32>
    %183 = vector.extract_strided_slice %2 {offsets = [0, 6], sizes = [32, 1], strides = [1, 1]} : vector<32x128xf32> to vector<32x1xf32>
    %184 = vector.extract_strided_slice %2 {offsets = [6, 16], sizes = [1, 1], strides = [1, 1]} : vector<32x128xf32> to vector<1x1xf32>
    %185 = vector.broadcast %183 : vector<32x1xf32> to vector<32x128xf32>
    %186 = arith.mulf %185, %182 : vector<32x128xf32>
    %187 = vector.broadcast %184 : vector<1x1xf32> to vector<32x128xf32>
    %188 = arith.addf %186, %187 : vector<32x128xf32>
    %cst_60 = arith.constant 5.000000e-01 : f32
    %189 = vector.broadcast %cst_60 : f32 to vector<32x128xf32>
    %190 = arith.mulf %189, %188 : vector<32x128xf32>
    %cst_61 = arith.constant 4.471500e-02 : f32
    %191 = vector.broadcast %cst_61 : f32 to vector<32x128xf32>
    %192 = arith.mulf %191, %188 : vector<32x128xf32>
    %193 = arith.mulf %192, %188 : vector<32x128xf32>
    %194 = arith.mulf %193, %188 : vector<32x128xf32>
    %195 = arith.addf %188, %194 : vector<32x128xf32>
    %cst_62 = arith.constant 0.797884583 : f32
    %196 = vector.broadcast %cst_62 : f32 to vector<32x128xf32>
    %197 = arith.mulf %196, %195 : vector<32x128xf32>
    %198 = math.tanh %197 : vector<32x128xf32>
    %cst_63 = arith.constant 1.000000e+00 : f32
    %199 = vector.broadcast %cst_63 : f32 to vector<32x128xf32>
    %200 = arith.addf %199, %198 : vector<32x128xf32>
    %201 = arith.mulf %190, %200 : vector<32x128xf32>
    %202 = vector.extract_strided_slice %201 {offsets = [0, 0], sizes = [16, 128], strides = [1, 1]} : vector<32x128xf32> to vector<16x128xf32>
    %cst_64 = arith.constant dense<0.000000e+00> : vector<128xf32>
    %203 = vector.multi_reduction <add>, %202, %cst_64 [0] : vector<16x128xf32> to vector<128xf32>
    %204 = vector.shape_cast %203 : vector<128xf32> to vector<1x128xf32>
    %205 = vector.extract_strided_slice %201 {offsets = [16, 0], sizes = [16, 128], strides = [1, 1]} : vector<32x128xf32> to vector<16x128xf32>
    %cst_65 = arith.constant dense<0.000000e+00> : vector<128xf32>
    %206 = vector.multi_reduction <add>, %205, %cst_65 [0] : vector<16x128xf32> to vector<128xf32>
    %207 = vector.shape_cast %206 : vector<128xf32> to vector<1x128xf32>
    %208 = tpu.concatenate %204, %207 in 1 : vector<1x128xf32>, vector<1x128xf32> -> vector<1x256xf32>
    %c7 = arith.constant 7 : index
    %c0_66 = arith.constant 0 : index
    %c0_67 = arith.constant 0 : index
    %209 = vector.load %arg1[%c7, %c0_66, %c0_67] : memref<8x128x128xbf16, #tpu.memory_space<vmem>>, vector<1x128x128xbf16>
    %210 = vector.shape_cast %209 : vector<1x128x128xbf16> to vector<128x128xbf16>
    %cst_68 = arith.constant dense<0.000000e+00> : vector<32x128xf32>
    %211 = tpu.matmul %1, %210, %cst_68 {dimension_numbers = #tpu.dot_dimension_numbers<[1], [0], [0], [1], [0, 0, 1, 1], [], []>} : vector<32x128xbf16>, vector<128x128xbf16>, vector<32x128xf32> -> vector<32x128xf32>
    %212 = vector.extract_strided_slice %2 {offsets = [0, 7], sizes = [32, 1], strides = [1, 1]} : vector<32x128xf32> to vector<32x1xf32>
    %213 = vector.extract_strided_slice %2 {offsets = [7, 16], sizes = [1, 1], strides = [1, 1]} : vector<32x128xf32> to vector<1x1xf32>
    %214 = vector.broadcast %212 : vector<32x1xf32> to vector<32x128xf32>
    %215 = arith.mulf %214, %211 : vector<32x128xf32>
    %216 = vector.broadcast %213 : vector<1x1xf32> to vector<32x128xf32>
    %217 = arith.addf %215, %216 : vector<32x128xf32>
    %cst_69 = arith.constant 5.000000e-01 : f32
    %218 = vector.broadcast %cst_69 : f32 to vector<32x128xf32>
    %219 = arith.mulf %218, %217 : vector<32x128xf32>
    %cst_70 = arith.constant 4.471500e-02 : f32
    %220 = vector.broadcast %cst_70 : f32 to vector<32x128xf32>
    %221 = arith.mulf %220, %217 : vector<32x128xf32>
    %222 = arith.mulf %221, %217 : vector<32x128xf32>
    %223 = arith.mulf %222, %217 : vector<32x128xf32>
    %224 = arith.addf %217, %223 : vector<32x128xf32>
    %cst_71 = arith.constant 0.797884583 : f32
    %225 = vector.broadcast %cst_71 : f32 to vector<32x128xf32>
    %226 = arith.mulf %225, %224 : vector<32x128xf32>
    %227 = math.tanh %226 : vector<32x128xf32>
    %cst_72 = arith.constant 1.000000e+00 : f32
    %228 = vector.broadcast %cst_72 : f32 to vector<32x128xf32>
    %229 = arith.addf %228, %227 : vector<32x128xf32>
    %230 = arith.mulf %219, %229 : vector<32x128xf32>
    %231 = vector.extract_strided_slice %230 {offsets = [0, 0], sizes = [16, 128], strides = [1, 1]} : vector<32x128xf32> to vector<16x128xf32>
    %cst_73 = arith.constant dense<0.000000e+00> : vector<128xf32>
    %232 = vector.multi_reduction <add>, %231, %cst_73 [0] : vector<16x128xf32> to vector<128xf32>
    %233 = vector.shape_cast %232 : vector<128xf32> to vector<1x128xf32>
    %234 = vector.extract_strided_slice %230 {offsets = [16, 0], sizes = [16, 128], strides = [1, 1]} : vector<32x128xf32> to vector<16x128xf32>
    %cst_74 = arith.constant dense<0.000000e+00> : vector<128xf32>
    %235 = vector.multi_reduction <add>, %234, %cst_74 [0] : vector<16x128xf32> to vector<128xf32>
    %236 = vector.shape_cast %235 : vector<128xf32> to vector<1x128xf32>
    %237 = tpu.concatenate %233, %236 in 1 : vector<1x128xf32>, vector<1x128xf32> -> vector<1x256xf32>
    %238 = tpu.concatenate %34, %63, %92, %121, %150, %179, %208, %237 in 0 : vector<1x256xf32>, vector<1x256xf32>, vector<1x256xf32>, vector<1x256xf32>, vector<1x256xf32>, vector<1x256xf32>, vector<1x256xf32>, vector<1x256xf32> -> vector<8x256xf32>
    %cst_75 = arith.constant dense<0.000000e+00> : vector<8x256xf32>
    %239 = tpu.matmul %3, %238, %cst_75 {dimension_numbers = #tpu.dot_dimension_numbers<[1], [0], [0], [1], [0, 0, 1, 1], [], []>} : vector<8x8xf32>, vector<8x256xf32>, vector<8x256xf32> -> vector<8x256xf32>
    %cst_76 = arith.constant dense<0xFF800000> : vector<256xf32>
    %240 = vector.multi_reduction <maximumf>, %239, %cst_76 [0] : vector<8x256xf32> to vector<256xf32>
    %241 = vector.shape_cast %240 : vector<256xf32> to vector<1x256xf32>
    %242 = vector.broadcast %241 : vector<1x256xf32> to vector<8x256xf32>
    %243 = arith.subf %239, %242 : vector<8x256xf32>
    %244 = math.exp %243 : vector<8x256xf32>
    %cst_77 = arith.constant dense<0.000000e+00> : vector<256xf32>
    %245 = vector.multi_reduction <add>, %244, %cst_77 [0] : vector<8x256xf32> to vector<256xf32>
    %246 = vector.shape_cast %245 : vector<256xf32> to vector<1x256xf32>
    %247 = tpu.reciprocal %246 {approx = true} : vector<1x256xf32> -> vector<1x256xf32>
    %248 = vector.broadcast %247 : vector<1x256xf32> to vector<8x256xf32>
    %249 = arith.mulf %244, %248 : vector<8x256xf32>
    %250 = vector.extract_strided_slice %249 {offsets = [0, 0], sizes = [1, 128], strides = [1, 1]} : vector<8x256xf32> to vector<1x128xf32>
    %251 = vector.extract_strided_slice %249 {offsets = [0, 128], sizes = [1, 128], strides = [1, 1]} : vector<8x256xf32> to vector<1x128xf32>
    %252 = vector.extract_strided_slice %27 {offsets = [0, 0], sizes = [16, 128], strides = [1, 1]} : vector<32x128xf32> to vector<16x128xf32>
    %253 = vector.broadcast %250 : vector<1x128xf32> to vector<16x128xf32>
    %254 = arith.mulf %252, %253 : vector<16x128xf32>
    %255 = vector.extract_strided_slice %27 {offsets = [16, 0], sizes = [16, 128], strides = [1, 1]} : vector<32x128xf32> to vector<16x128xf32>
    %256 = vector.broadcast %251 : vector<1x128xf32> to vector<16x128xf32>
    %257 = arith.mulf %255, %256 : vector<16x128xf32>
    %258 = tpu.concatenate %254, %257 in 1 : vector<16x128xf32>, vector<16x128xf32> -> vector<16x256xf32>
    %259 = vector.extract_strided_slice %249 {offsets = [1, 0], sizes = [1, 128], strides = [1, 1]} : vector<8x256xf32> to vector<1x128xf32>
    %260 = vector.extract_strided_slice %249 {offsets = [1, 128], sizes = [1, 128], strides = [1, 1]} : vector<8x256xf32> to vector<1x128xf32>
    %261 = vector.extract_strided_slice %56 {offsets = [0, 0], sizes = [16, 128], strides = [1, 1]} : vector<32x128xf32> to vector<16x128xf32>
    %262 = vector.broadcast %259 : vector<1x128xf32> to vector<16x128xf32>
    %263 = arith.mulf %261, %262 : vector<16x128xf32>
    %264 = vector.extract_strided_slice %56 {offsets = [16, 0], sizes = [16, 128], strides = [1, 1]} : vector<32x128xf32> to vector<16x128xf32>
    %265 = vector.broadcast %260 : vector<1x128xf32> to vector<16x128xf32>
    %266 = arith.mulf %264, %265 : vector<16x128xf32>
    %267 = tpu.concatenate %263, %266 in 1 : vector<16x128xf32>, vector<16x128xf32> -> vector<16x256xf32>
    %268 = vector.extract_strided_slice %249 {offsets = [2, 0], sizes = [1, 128], strides = [1, 1]} : vector<8x256xf32> to vector<1x128xf32>
    %269 = vector.extract_strided_slice %249 {offsets = [2, 128], sizes = [1, 128], strides = [1, 1]} : vector<8x256xf32> to vector<1x128xf32>
    %270 = vector.extract_strided_slice %85 {offsets = [0, 0], sizes = [16, 128], strides = [1, 1]} : vector<32x128xf32> to vector<16x128xf32>
    %271 = vector.broadcast %268 : vector<1x128xf32> to vector<16x128xf32>
    %272 = arith.mulf %270, %271 : vector<16x128xf32>
    %273 = vector.extract_strided_slice %85 {offsets = [16, 0], sizes = [16, 128], strides = [1, 1]} : vector<32x128xf32> to vector<16x128xf32>
    %274 = vector.broadcast %269 : vector<1x128xf32> to vector<16x128xf32>
    %275 = arith.mulf %273, %274 : vector<16x128xf32>
    %276 = tpu.concatenate %272, %275 in 1 : vector<16x128xf32>, vector<16x128xf32> -> vector<16x256xf32>
    %277 = vector.extract_strided_slice %249 {offsets = [3, 0], sizes = [1, 128], strides = [1, 1]} : vector<8x256xf32> to vector<1x128xf32>
    %278 = vector.extract_strided_slice %249 {offsets = [3, 128], sizes = [1, 128], strides = [1, 1]} : vector<8x256xf32> to vector<1x128xf32>
    %279 = vector.extract_strided_slice %114 {offsets = [0, 0], sizes = [16, 128], strides = [1, 1]} : vector<32x128xf32> to vector<16x128xf32>
    %280 = vector.broadcast %277 : vector<1x128xf32> to vector<16x128xf32>
    %281 = arith.mulf %279, %280 : vector<16x128xf32>
    %282 = vector.extract_strided_slice %114 {offsets = [16, 0], sizes = [16, 128], strides = [1, 1]} : vector<32x128xf32> to vector<16x128xf32>
    %283 = vector.broadcast %278 : vector<1x128xf32> to vector<16x128xf32>
    %284 = arith.mulf %282, %283 : vector<16x128xf32>
    %285 = tpu.concatenate %281, %284 in 1 : vector<16x128xf32>, vector<16x128xf32> -> vector<16x256xf32>
    %286 = vector.extract_strided_slice %249 {offsets = [4, 0], sizes = [1, 128], strides = [1, 1]} : vector<8x256xf32> to vector<1x128xf32>
    %287 = vector.extract_strided_slice %249 {offsets = [4, 128], sizes = [1, 128], strides = [1, 1]} : vector<8x256xf32> to vector<1x128xf32>
    %288 = vector.extract_strided_slice %143 {offsets = [0, 0], sizes = [16, 128], strides = [1, 1]} : vector<32x128xf32> to vector<16x128xf32>
    %289 = vector.broadcast %286 : vector<1x128xf32> to vector<16x128xf32>
    %290 = arith.mulf %288, %289 : vector<16x128xf32>
    %291 = vector.extract_strided_slice %143 {offsets = [16, 0], sizes = [16, 128], strides = [1, 1]} : vector<32x128xf32> to vector<16x128xf32>
    %292 = vector.broadcast %287 : vector<1x128xf32> to vector<16x128xf32>
    %293 = arith.mulf %291, %292 : vector<16x128xf32>
    %294 = tpu.concatenate %290, %293 in 1 : vector<16x128xf32>, vector<16x128xf32> -> vector<16x256xf32>
    %295 = vector.extract_strided_slice %249 {offsets = [5, 0], sizes = [1, 128], strides = [1, 1]} : vector<8x256xf32> to vector<1x128xf32>
    %296 = vector.extract_strided_slice %249 {offsets = [5, 128], sizes = [1, 128], strides = [1, 1]} : vector<8x256xf32> to vector<1x128xf32>
    %297 = vector.extract_strided_slice %172 {offsets = [0, 0], sizes = [16, 128], strides = [1, 1]} : vector<32x128xf32> to vector<16x128xf32>
    %298 = vector.broadcast %295 : vector<1x128xf32> to vector<16x128xf32>
    %299 = arith.mulf %297, %298 : vector<16x128xf32>
    %300 = vector.extract_strided_slice %172 {offsets = [16, 0], sizes = [16, 128], strides = [1, 1]} : vector<32x128xf32> to vector<16x128xf32>
    %301 = vector.broadcast %296 : vector<1x128xf32> to vector<16x128xf32>
    %302 = arith.mulf %300, %301 : vector<16x128xf32>
    %303 = tpu.concatenate %299, %302 in 1 : vector<16x128xf32>, vector<16x128xf32> -> vector<16x256xf32>
    %304 = vector.extract_strided_slice %249 {offsets = [6, 0], sizes = [1, 128], strides = [1, 1]} : vector<8x256xf32> to vector<1x128xf32>
    %305 = vector.extract_strided_slice %249 {offsets = [6, 128], sizes = [1, 128], strides = [1, 1]} : vector<8x256xf32> to vector<1x128xf32>
    %306 = vector.extract_strided_slice %201 {offsets = [0, 0], sizes = [16, 128], strides = [1, 1]} : vector<32x128xf32> to vector<16x128xf32>
    %307 = vector.broadcast %304 : vector<1x128xf32> to vector<16x128xf32>
    %308 = arith.mulf %306, %307 : vector<16x128xf32>
    %309 = vector.extract_strided_slice %201 {offsets = [16, 0], sizes = [16, 128], strides = [1, 1]} : vector<32x128xf32> to vector<16x128xf32>
    %310 = vector.broadcast %305 : vector<1x128xf32> to vector<16x128xf32>
    %311 = arith.mulf %309, %310 : vector<16x128xf32>
    %312 = tpu.concatenate %308, %311 in 1 : vector<16x128xf32>, vector<16x128xf32> -> vector<16x256xf32>
    %313 = vector.extract_strided_slice %249 {offsets = [7, 0], sizes = [1, 128], strides = [1, 1]} : vector<8x256xf32> to vector<1x128xf32>
    %314 = vector.extract_strided_slice %249 {offsets = [7, 128], sizes = [1, 128], strides = [1, 1]} : vector<8x256xf32> to vector<1x128xf32>
    %315 = vector.extract_strided_slice %230 {offsets = [0, 0], sizes = [16, 128], strides = [1, 1]} : vector<32x128xf32> to vector<16x128xf32>
    %316 = vector.broadcast %313 : vector<1x128xf32> to vector<16x128xf32>
    %317 = arith.mulf %315, %316 : vector<16x128xf32>
    %318 = vector.extract_strided_slice %230 {offsets = [16, 0], sizes = [16, 128], strides = [1, 1]} : vector<32x128xf32> to vector<16x128xf32>
    %319 = vector.broadcast %314 : vector<1x128xf32> to vector<16x128xf32>
    %320 = arith.mulf %318, %319 : vector<16x128xf32>
    %321 = tpu.concatenate %317, %320 in 1 : vector<16x128xf32>, vector<16x128xf32> -> vector<16x256xf32>
    %322 = tpu.concatenate %258, %267, %276, %285, %294, %303, %312, %321 in 0 : vector<16x256xf32>, vector<16x256xf32>, vector<16x256xf32>, vector<16x256xf32>, vector<16x256xf32>, vector<16x256xf32>, vector<16x256xf32>, vector<16x256xf32> -> vector<128x256xf32>
    %c0_78 = arith.constant 0 : index
    %c0_79 = arith.constant 0 : index
    %323 = vector.load %arg2[%c0_78, %c0_79] : memref<4x128xf32, #tpu.memory_space<vmem>>, vector<4x128xf32>
    %cst_80 = arith.constant dense<0.000000e+00> : vector<4x256xf32>
    %324 = tpu.matmul %323, %322, %cst_80 {dimension_numbers = #tpu.dot_dimension_numbers<[1], [0], [0], [1], [0, 0, 1, 1], [], []>} : vector<4x128xf32>, vector<128x256xf32>, vector<4x256xf32> -> vector<4x256xf32>
    %325 = vector.broadcast %4 : vector<4x1xf32> to vector<4x256xf32>
    %326 = arith.addf %324, %325 : vector<4x256xf32>
    %cst_81 = arith.constant 5.000000e-01 : f32
    %327 = vector.broadcast %cst_81 : f32 to vector<4x256xf32>
    %328 = arith.mulf %327, %326 : vector<4x256xf32>
    %cst_82 = arith.constant 4.471500e-02 : f32
    %329 = vector.broadcast %cst_82 : f32 to vector<4x256xf32>
    %330 = arith.mulf %329, %326 : vector<4x256xf32>
    %331 = arith.mulf %330, %326 : vector<4x256xf32>
    %332 = arith.mulf %331, %326 : vector<4x256xf32>
    %333 = arith.addf %326, %332 : vector<4x256xf32>
    %cst_83 = arith.constant 0.797884583 : f32
    %334 = vector.broadcast %cst_83 : f32 to vector<4x256xf32>
    %335 = arith.mulf %334, %333 : vector<4x256xf32>
    %336 = math.tanh %335 : vector<4x256xf32>
    %cst_84 = arith.constant 1.000000e+00 : f32
    %337 = vector.broadcast %cst_84 : f32 to vector<4x256xf32>
    %338 = arith.addf %337, %336 : vector<4x256xf32>
    %339 = arith.mulf %328, %338 : vector<4x256xf32>
    %340 = vector.extract_strided_slice %339 {offsets = [0, 0], sizes = [4, 128], strides = [1, 1]} : vector<4x256xf32> to vector<4x128xf32>
    %341 = vector.extract_strided_slice %339 {offsets = [0, 128], sizes = [4, 128], strides = [1, 1]} : vector<4x256xf32> to vector<4x128xf32>
    %342 = vector.shape_cast %340 : vector<4x128xf32> to vector<1x4x128xf32>
    %343 = vector.shape_cast %341 : vector<4x128xf32> to vector<1x4x128xf32>
    %344 = tpu.concatenate %342, %343 in 0 : vector<1x4x128xf32>, vector<1x4x128xf32> -> vector<2x4x128xf32>
    %345 = vector.shape_cast %344 : vector<2x4x128xf32> to vector<2x1x4x128xf32>
    %c0_85 = arith.constant 0 : index
    %c0_86 = arith.constant 0 : index
    %c0_87 = arith.constant 0 : index
    %346 = vector.load %arg3[%c0_85, %c0_86, %c0_87] : memref<4x4x128xf32, #tpu.memory_space<vmem>>, vector<4x4x128xf32>
    %347 = vector.shape_cast %346 : vector<4x4x128xf32> to vector<1x4x4x128xf32>
    %348 = vector.broadcast %345 : vector<2x1x4x128xf32> to vector<2x4x4x128xf32>
    %349 = vector.broadcast %347 : vector<1x4x4x128xf32> to vector<2x4x4x128xf32>
    %350 = arith.mulf %348, %349 : vector<2x4x4x128xf32>
    %cst_88 = arith.constant dense<0.000000e+00> : vector<2x4x4xf32>
    %351 = vector.multi_reduction <add>, %350, %cst_88 [3] : vector<2x4x4x128xf32> to vector<2x4x4xf32>
    %cst_89 = arith.constant dense<0.000000e+00> : vector<2x4xf32>
    %352 = vector.multi_reduction <add>, %351, %cst_89 [2] : vector<2x4x4xf32> to vector<2x4xf32>
    %353 = vector.broadcast %5 : vector<1x4xf32> to vector<2x4xf32>
    %354 = arith.addf %352, %353 : vector<2x4xf32>
    %c0_90 = arith.constant 0 : index
    %c0_91 = arith.constant 0 : index
    %355 = vector.load %arg5[%c0_90, %c0_91] : memref<2x4xf32, #tpu.memory_space<vmem>>, vector<2x4xf32>
    tpu.vector_store %arg5[%c0_90, %c0_91], %354 {strides = array<i32>} : memref<2x4xf32, #tpu.memory_space<vmem>>, vector<2x4xf32>,
    return
  }
}

</mosaic_0001>

<llo_original>
// kernel: lmda_forward.1
$region0: #{lmda_forward.1}
  #allocation0 [shape = 'u32[]', space=smem, size = 0x4, offset = 0x4, fixed_abs, tag = 'smem constant byte address 0x4 - core index']
  #allocation1 [shape = 'u32[144,128]{1,0:T(1,128)}', space=vmem, size = 0x12000, scoped, tag = 'internal scratch']
  %s0 = inlined_call_operand.hbm [shape: f32[32,128], index: 0, kind: input, shape index: {}]
  %s1 = inlined_call_operand.hbm [shape: bf16[8,128,128], index: 1, kind: input, shape index: {}]
  %s2 = inlined_call_operand.vmem [shape: f32[4,128], index: 2, kind: input, shape index: {}]
  %s3 = inlined_call_operand.hbm [shape: f32[4,4,128], index: 3, kind: input, shape index: {}]
  %s4 = inlined_call_operand.hbm [shape: f32[32,128], index: 4, kind: input, shape index: {}]
  %s5 = inlined_call_operand.hbm [shape: f32[2,4], index: 5, kind: output, shape index: {}]
  %s6 = sld [smem:[#allocation0]]
  $region46: #{lmda_forward.1} parent=0
    _
  %s8 = ssub.s32 1, %s6
  %s9 = scalar_select 0, %s8, %s6
  $region1: #{lmda_forward.1} parent=0
    #allocation2 [shape = 'u8[16384]{0}', space=vmem, size = 0x4000, scoped, tag = 'input window, operand 0, single buffered']
    #allocation3 [shape = 's32[1]{0}', space=sflag, size = 0x4, scoped, tag = 'scoped memory for lmda_forward.1']
    #allocation4 [shape = 's32[1]{0}', space=sflag, size = 0x4, scoped, tag = 'scoped memory for lmda_forward.1']
    #allocation5 [shape = 'u8[262144]{0}', space=vmem, size = 0x40000, scoped, tag = 'input window, operand 1, single buffered']
    #allocation6 [shape = 's32[1]{0}', space=sflag, size = 0x4, scoped, tag = 'scoped memory for lmda_forward.1']
    #allocation7 [shape = 'u8[8192]{0}', space=vmem, size = 0x2000, scoped, tag = 'input window, operand 3, single buffered']
    #allocation8 [shape = 'u8[16384]{0}', space=vmem, size = 0x4000, scoped, tag = 'input window, operand 4, single buffered']
    #allocation9 [shape = 's32[1]{0}', space=sflag, size = 0x4, scoped, tag = 'scoped memory for lmda_forward.1']
    #allocation10 [shape = 'u8[1024]{0}', space=vmem, size = 0x400, scoped, tag = 'output window, operand 0, single buffered']
    %10 = vsyncpa [#allocation3], 0
    %11 = vsyncpa [#allocation6], 0
    %12 = vsyncpa [#allocation9], 0
    %13 = vsyncpa [#allocation4], 0
    // Predicated region
    $region2: #{lmda_forward.1} parent=1 // pred_check
      _
    $region3: #{lmda_forward.1} parent=1 // pred_check_branch
      %15 = sbr.rel (0) target = $region5
    $region4: #{lmda_forward.1} parent=1 // pred_region
      %s17 = ssub.s32 512, 512
      %18 = vsyncadd [#allocation3], %s17
      %s19 = sshll.u32 [#allocation2], 4
      %s20 = int_to_ptr.vmem [resolvable:$true] %s19
      %25 = dma.hbm_to_vmem [thread:$0]  %s0, 512, %s20, [#allocation3], 128, 128, 8
    $region5: #{lmda_forward.1} parent=1 // pred_fallthru
      _
    // Predicated region
    $region6: #{lmda_forward.1} parent=1 // pred_check
      _
    $region7: #{lmda_forward.1} parent=1 // pred_check_branch
      %27 = sbr.rel (0) target = $region9
    $region8: #{lmda_forward.1} parent=1 // pred_region
      %s29 = ssub.s32 8192, 8192
      %30 = vsyncadd [#allocation6], %s29
      %s31 = sshll.u32 [#allocation5], 4
      %s32 = int_to_ptr.vmem [resolvable:$true] %s31
      %37 = dma.hbm_to_vmem [thread:$0]  %s1, 8192, %s32, [#allocation6], 64, 64, 4
    $region9: #{lmda_forward.1} parent=1 // pred_fallthru
      _
    // Predicated region
    $region10: #{lmda_forward.1} parent=1 // pred_check
      _
    $region11: #{lmda_forward.1} parent=1 // pred_check_branch
      %39 = sbr.rel (0) target = $region13
    $region12: #{lmda_forward.1} parent=1 // pred_region
      _
    $region13: #{lmda_forward.1} parent=1 // pred_fallthru
      _
    // Predicated region
    $region14: #{lmda_forward.1} parent=1 // pred_check
      _
    $region15: #{lmda_forward.1} parent=1 // pred_check_branch
      %41 = sbr.rel (0) target = $region17
    $region16: #{lmda_forward.1} parent=1 // pred_region
      %s43 = ssub.s32 256, 256
      %44 = vsyncadd [#allocation6], %s43
      %s45 = sshll.u32 [#allocation7], 4
      %s46 = int_to_ptr.vmem [resolvable:$true] %s45
      %51 = dma.hbm_to_vmem [thread:$0]  %s3, 256, %s46, [#allocation6], 64, 64, 4
    $region17: #{lmda_forward.1} parent=1 // pred_fallthru
      _
    // Predicated region
    $region18: #{lmda_forward.1} parent=1 // pred_check
      _
    $region19: #{lmda_forward.1} parent=1 // pred_check_branch
      %53 = sbr.rel (0) target = $region21
    $region20: #{lmda_forward.1} parent=1 // pred_region
      %s55 = ssub.s32 512, 512
      %56 = vsyncadd [#allocation9], %s55
      %s57 = sshll.u32 [#allocation8], 4
      %s58 = int_to_ptr.vmem [resolvable:$true] %s57
      %63 = dma.hbm_to_vmem [thread:$0]  %s4, 512, %s58, [#allocation9], 128, 128, 8
    $region21: #{lmda_forward.1} parent=1 // pred_fallthru
      _
    // Predicated region
    $region22: #{lmda_forward.1} parent=1 // pred_check
      _
    $region23: #{lmda_forward.1} parent=1 // pred_check_branch
      %65 = sbr.rel (0) target = $region25
    $region24: #{lmda_forward.1} parent=1 // pred_region
      %66 = dma.done [#allocation3], 512
    $region25: #{lmda_forward.1} parent=1 // pred_fallthru
      _
    // Predicated region
    $region26: #{lmda_forward.1} parent=1 // pred_check
      _
    $region27: #{lmda_forward.1} parent=1 // pred_check_branch
      %68 = sbr.rel (0) target = $region29
    $region28: #{lmda_forward.1} parent=1 // pred_region
      %69 = dma.done [#allocation6], 8192
    $region29: #{lmda_forward.1} parent=1 // pred_fallthru
      _
    // Predicated region
    $region30: #{lmda_forward.1} parent=1 // pred_check
      _
    $region31: #{lmda_forward.1} parent=1 // pred_check_branch
      %71 = sbr.rel (0) target = $region33
    $region32: #{lmda_forward.1} parent=1 // pred_region
      %72 = dma.done [#allocation6], 256
    $region33: #{lmda_forward.1} parent=1 // pred_fallthru
      _
    // Predicated region
    $region34: #{lmda_forward.1} parent=1 // pred_check
      _
    $region35: #{lmda_forward.1} parent=1 // pred_check_branch
      %74 = sbr.rel (0) target = $region37
    $region36: #{lmda_forward.1} parent=1 // pred_region
      %75 = dma.done [#allocation9], 512
    $region37: #{lmda_forward.1} parent=1 // pred_fallthru
      _
    %v77 = vld [vmem:[#allocation2] sm:$0xff]
    %v78 = vld [vmem:[#allocation2 + $0x8] sm:$0xff]
    %v79 = vld [vmem:[#allocation2 + $0x10] sm:$0xff]
    %v80 = vld [vmem:[#allocation2 + $0x18] sm:$0xff]
    %v81 = vpack.c.bf16 %v78, %v77
    %v82 = vpack.c.bf16 %v80, %v79
    %v83 = vld [vmem:[#allocation8] sm:$0xff]
    %v84 = vld [vmem:[#allocation8 + $0x8] sm:$0xff]
    %v85 = vld [vmem:[#allocation8 + $0x10] sm:$0xff]
    %v86 = vld [vmem:[#allocation8 + $0x18] sm:$0xff]
    %v87 = vld [vmem:[#allocation5] sm:$0xf]
    %v88 = vld [vmem:[#allocation5 + $0x4] sm:$0xf]
    %v89 = vld [vmem:[#allocation5 + $0x8] sm:$0xf]
    %v90 = vld [vmem:[#allocation5 + $0xc] sm:$0xf]
    %v91 = vld [vmem:[#allocation5 + $0x10] sm:$0xf]
    %v92 = vld [vmem:[#allocation5 + $0x14] sm:$0xf]
    %v93 = vld [vmem:[#allocation5 + $0x18] sm:$0xf]
    %v94 = vld [vmem:[#allocation5 + $0x1c] sm:$0xf]
    %v95 = vld [vmem:[#allocation5 + $0x20] sm:$0xf]
    %v96 = vld [vmem:[#allocation5 + $0x24] sm:$0xf]
    %v97 = vld [vmem:[#allocation5 + $0x28] sm:$0xf]
    %v98 = vld [vmem:[#allocation5 + $0x2c] sm:$0xf]
    %v99 = vld [vmem:[#allocation5 + $0x30] sm:$0xf]
    %v100 = vld [vmem:[#allocation5 + $0x34] sm:$0xf]
    %v101 = vld [vmem:[#allocation5 + $0x38] sm:$0xf]
    %v102 = vld [vmem:[#allocation5 + $0x3c] sm:$0xf]
    %v119 = vunpack.c.l.b16 %v87
    %v120 = vunpack.c.l.b16 %v88
    %v121 = vunpack.c.l.b16 %v89
    %v122 = vunpack.c.l.b16 %v90
    %v123 = vunpack.c.l.b16 %v91
    %v124 = vunpack.c.l.b16 %v92
    %v125 = vunpack.c.l.b16 %v93
    %v126 = vunpack.c.l.b16 %v94
    %v127 = vunpack.c.l.b16 %v95
    %v128 = vunpack.c.l.b16 %v96
    %v129 = vunpack.c.l.b16 %v97
    %v130 = vunpack.c.l.b16 %v98
    %v131 = vunpack.c.l.b16 %v99
    %v132 = vunpack.c.l.b16 %v100
    %v133 = vunpack.c.l.b16 %v101
    %v134 = vunpack.c.l.b16 %v102
    %v135 = vpack.c.b16 %v120, %v119
    %v136 = vpack.c.b16 %v122, %v121
    %v137 = vpack.c.b16 %v124, %v123
    %v138 = vpack.c.b16 %v126, %v125
    %v139 = vpack.c.b16 %v128, %v127
    %v140 = vpack.c.b16 %v130, %v129
    %v141 = vpack.c.b16 %v132, %v131
    %v142 = vpack.c.b16 %v134, %v133
    %151 = vmatprep.subr.bf16.mxu0 0
    %152 = vmatpush1.bf16.msra.mxu0 %v142
    %153 = vmatprep.subr.bf16.mxu0 0
    %154 = vmatpush1.bf16.msra.mxu0 %v141
    %155 = vmatprep.subr.bf16.mxu0 0
    %156 = vmatpush1.bf16.msra.mxu0 %v140
    %157 = vmatprep.subr.bf16.mxu0 0
    %158 = vmatpush1.bf16.msra.mxu0 %v139
    %159 = vmatprep.subr.bf16.mxu0 0
    %160 = vmatpush1.bf16.msra.mxu0 %v138
    %161 = vmatprep.subr.bf16.mxu0 0
    %162 = vmatpush1.bf16.msra.mxu0 %v137
    %163 = vmatprep.subr.bf16.mxu0 0
    %164 = vmatpush1.bf16.msra.mxu0 %v136
    %165 = vmatprep.subr.bf16.mxu0 0
    %166 = vmatpush1.bf16.msra.mxu0 %v135
    %167 = vmatprep.subr.bf16.mxu0 0
    %168 = vmatpush2.bf16.msra.mxu0 0
    %169 = vmatprep.subr.bf16.mxu0 0
    %170 = vmatpush2.bf16.msra.mxu0 0
    %171 = vmatprep.subr.bf16.mxu0 0
    %172 = vmatpush2.bf16.msra.mxu0 0
    %173 = vmatprep.subr.bf16.mxu0 0
    %174 = vmatpush2.bf16.msra.mxu0 0
    %175 = vmatprep.subr.bf16.mxu0 0
    %176 = vmatpush2.bf16.msra.mxu0 0
    %177 = vmatprep.subr.bf16.mxu0 0
    %178 = vmatpush2.bf16.msra.mxu0 0
    %179 = vmatprep.subr.bf16.mxu0 0
    %180 = vmatpush2.bf16.msra.mxu0 0
    %181 = vmatprep.subr.bf16.mxu0 0
    %182 = vmatpush2.bf16.msra.mxu0 0
    %183 = vmatprep.mubr.bf16.mxu0 0
    %184 = vmatmul.mubr.bf16.gmra.mxu0 %v81
    %v185 = vpop.f32.mrf.mxu0
    %v186 = vadd.f32 0.0, %v185
    %v187 = vpop.f32.mrf.mxu0
    %v188 = vpop.f32.mrf.mxu0
    %v189 = vadd.f32 0.0, %v188
    %v190 = vpop.f32.mrf.mxu0
    %191 = vmatprep.mubr.bf16.mxu0 0
    %192 = vmatmul.mubr.bf16.gmra.mxu0 %v82
    %v193 = vpop.f32.mrf.mxu0
    %v194 = vadd.f32 0.0, %v193
    %v195 = vpop.f32.mrf.mxu0
    %v196 = vpop.f32.mrf.mxu0
    %v197 = vadd.f32 0.0, %v196
    %v198 = vpop.f32.mrf.mxu0
    %199 = vdwg.mxu0
    %201 = vset.pattern.permute.xlu0 0
    %202 = vperm.xlu0 %201, %v83
    %v203 = vpop.permute.xlu0 %202
    %206 = vset.pattern.permute.xlu0 0
    %207 = vperm.xlu0 %206, %v84
    %v208 = vpop.permute.xlu0 %207
    %211 = vset.pattern.permute.xlu0 0
    %212 = vperm.xlu0 %211, %v85
    %v213 = vpop.permute.xlu0 %212
    %216 = vset.pattern.permute.xlu0 0
    %217 = vperm.xlu0 %216, %v86
    %v218 = vpop.permute.xlu0 %217
    %v220 = vmul.f32 %v203, %v186
    %v221 = vmul.f32 %v208, %v189
    %v222 = vmul.f32 %v213, %v194
    %v223 = vmul.f32 %v218, %v197
    %224 = vrot.lane.b32.xlu0 %v83, 112
    %v225 = vpop.permute.xlu0 %224
    %s226 = vtos %v225
    %v227 = vstv %s226
    %v229 = vadd.f32 %v220, %v227
    %v230 = vadd.f32 %v221, %v227
    %v231 = vadd.f32 %v222, %v227
    %v232 = vadd.f32 %v223, %v227
    %v233 = vmul.f32 %v229, 0.5
    %v234 = vmul.f32 %v230, 0.5
    %v235 = vmul.f32 %v231, 0.5
    %v236 = vmul.f32 %v232, 0.5
    %v237 = vmul.f32 %v229, 0.044715
    %v238 = vmul.f32 %v230, 0.044715
    %v239 = vmul.f32 %v231, 0.044715
    %v240 = vmul.f32 %v232, 0.044715
    %v241 = vmul.f32 %v237, %v229
    %v242 = vmul.f32 %v238, %v230
    %v243 = vmul.f32 %v239, %v231
    %v244 = vmul.f32 %v240, %v232
    %v245 = vmul.f32 %v241, %v229
    %v246 = vmul.f32 %v242, %v230
    %v247 = vmul.f32 %v243, %v231
    %v248 = vmul.f32 %v244, %v232
    %v249 = vadd.f32 %v229, %v245
    %v250 = vadd.f32 %v230, %v246
    %v251 = vadd.f32 %v231, %v247
    %v252 = vadd.f32 %v232, %v248
    %v253 = vmul.f32 %v249, 0.7978846
    %v254 = vmul.f32 %v250, 0.7978846
    %v255 = vmul.f32 %v251, 0.7978846
    %v256 = vmul.f32 %v252, 0.7978846
    %v257 = vtanh.pop %v253
    %v258 = vtanh.pop %v254
    %v259 = vtanh.pop %v255
    %v260 = vtanh.pop %v256
    %v261 = vadd.f32 %v257, 1.0
    %v262 = vadd.f32 %v258, 1.0
    %v263 = vadd.f32 %v259, 1.0
    %v264 = vadd.f32 %v260, 1.0
    %v265 = vmul.f32 %v233, %v261
    %v266 = vmul.f32 %v234, %v262
    %v267 = vmul.f32 %v235, %v263
    %v268 = vmul.f32 %v236, %v264
    %v269 = vadd.f32 %v265, %v266
    %v270 = vrot.slane %v269, 4
    %v271 = vadd.f32 %v269, %v270
    %v272 = vrot.slane %v271, 2
    %v273 = vadd.f32 %v271, %v272
    %v274 = vrot.slane %v273, 1
    %v275 = vadd.f32 %v273, %v274
    %v276 = vadd.f32 %v267, %v268
    %v277 = vrot.slane %v276, 4
    %v278 = vadd.f32 %v276, %v277
    %v279 = vrot.slane %v278, 2
    %v280 = vadd.f32 %v278, %v279
    %v281 = vrot.slane %v280, 1
    %v282 = vadd.f32 %v280, %v281
    %s283 = scalar_lea.vmem [#allocation5], 64
    %v284 = vld [vmem:[%s283] sm:$0xf]
    %v285 = vld [vmem:[%s283 + $0x4] sm:$0xf]
    %v286 = vld [vmem:[%s283 + $0x8] sm:$0xf]
    %v287 = vld [vmem:[%s283 + $0xc] sm:$0xf]
    %v288 = vld [vmem:[%s283 + $0x10] sm:$0xf]
    %v289 = vld [vmem:[%s283 + $0x14] sm:$0xf]
    %v290 = vld [vmem:[%s283 + $0x18] sm:$0xf]
    %v291 = vld [vmem:[%s283 + $0x1c] sm:$0xf]
    %v292 = vld [vmem:[%s283 + $0x20] sm:$0xf]
    %v293 = vld [vmem:[%s283 + $0x24] sm:$0xf]
    %v294 = vld [vmem:[%s283 + $0x28] sm:$0xf]
    %v295 = vld [vmem:[%s283 + $0x2c] sm:$0xf]
    %v296 = vld [vmem:[%s283 + $0x30] sm:$0xf]
    %v297 = vld [vmem:[%s283 + $0x34] sm:$0xf]
    %v298 = vld [vmem:[%s283 + $0x38] sm:$0xf]
    %v299 = vld [vmem:[%s283 + $0x3c] sm:$0xf]
    %v316 = vunpack.c.l.b16 %v284
    %v317 = vunpack.c.l.b16 %v285
    %v318 = vunpack.c.l.b16 %v286
    %v319 = vunpack.c.l.b16 %v287
    %v320 = vunpack.c.l.b16 %v288
    %v321 = vunpack.c.l.b16 %v289
    %v322 = vunpack.c.l.b16 %v290
    %v323 = vunpack.c.l.b16 %v291
    %v324 = vunpack.c.l.b16 %v292
    %v325 = vunpack.c.l.b16 %v293
    %v326 = vunpack.c.l.b16 %v294
    %v327 = vunpack.c.l.b16 %v295
    %v328 = vunpack.c.l.b16 %v296
    %v329 = vunpack.c.l.b16 %v297
    %v330 = vunpack.c.l.b16 %v298
    %v331 = vunpack.c.l.b16 %v299
    %v332 = vpack.c.b16 %v317, %v316
    %v333 = vpack.c.b16 %v319, %v318
    %v334 = vpack.c.b16 %v321, %v320
    %v335 = vpack.c.b16 %v323, %v322
    %v336 = vpack.c.b16 %v325, %v324
    %v337 = vpack.c.b16 %v327, %v326
    %v338 = vpack.c.b16 %v329, %v328
    %v339 = vpack.c.b16 %v331, %v330
    %348 = vmatprep.subr.bf16.mxu0 0
    %349 = vmatpush1.bf16.msra.mxu0 %v339
    %350 = vmatprep.subr.bf16.mxu0 0
    %351 = vmatpush1.bf16.msra.mxu0 %v338
    %352 = vmatprep.subr.bf16.mxu0 0
    %353 = vmatpush1.bf16.msra.mxu0 %v337
    %354 = vmatprep.subr.bf16.mxu0 0
    %355 = vmatpush1.bf16.msra.mxu0 %v336
    %356 = vmatprep.subr.bf16.mxu0 0
    %357 = vmatpush1.bf16.msra.mxu0 %v335
    %358 = vmatprep.subr.bf16.mxu0 0
    %359 = vmatpush1.bf16.msra.mxu0 %v334
    %360 = vmatprep.subr.bf16.mxu0 0
    %361 = vmatpush1.bf16.msra.mxu0 %v333
    %362 = vmatprep.subr.bf16.mxu0 0
    %363 = vmatpush1.bf16.msra.mxu0 %v332
    %364 = vmatprep.subr.bf16.mxu0 0
    %365 = vmatpush2.bf16.msra.mxu0 0
    %366 = vmatprep.subr.bf16.mxu0 0
    %367 = vmatpush2.bf16.msra.mxu0 0
    %368 = vmatprep.subr.bf16.mxu0 0
    %369 = vmatpush2.bf16.msra.mxu0 0
    %370 = vmatprep.subr.bf16.mxu0 0
    %371 = vmatpush2.bf16.msra.mxu0 0
    %372 = vmatprep.subr.bf16.mxu0 0
    %373 = vmatpush2.bf16.msra.mxu0 0
    %374 = vmatprep.subr.bf16.mxu0 0
    %375 = vmatpush2.bf16.msra.mxu0 0
    %376 = vmatprep.subr.bf16.mxu0 0
    %377 = vmatpush2.bf16.msra.mxu0 0
    %378 = vmatprep.subr.bf16.mxu0 0
    %379 = vmatpush2.bf16.msra.mxu0 0
    %380 = vmatprep.mubr.bf16.mxu0 0
    %381 = vmatmul.mubr.bf16.gmra.mxu0 %v81
    %v382 = vpop.f32.mrf.mxu0
    %v383 = vadd.f32 0.0, %v382
    %v384 = vpop.f32.mrf.mxu0
    %v385 = vpop.f32.mrf.mxu0
    %v386 = vadd.f32 0.0, %v385
    %v387 = vpop.f32.mrf.mxu0
    %388 = vmatprep.mubr.bf16.mxu0 0
    %389 = vmatmul.mubr.bf16.gmra.mxu0 %v82
    %v390 = vpop.f32.mrf.mxu0
    %v391 = vadd.f32 0.0, %v390
    %v392 = vpop.f32.mrf.mxu0
    %v393 = vpop.f32.mrf.mxu0
    %v394 = vadd.f32 0.0, %v393
    %v395 = vpop.f32.mrf.mxu0
    %396 = vdwg.mxu0
    %397 = vset.pattern.permute.xlu0 1
    %398 = vperm.xlu0 %397, %v83
    %v399 = vpop.permute.xlu0 %398
    %401 = vset.pattern.permute.xlu0 1
    %402 = vperm.xlu0 %401, %v84
    %v403 = vpop.permute.xlu0 %402
    %405 = vset.pattern.permute.xlu0 1
    %406 = vperm.xlu0 %405, %v85
    %v407 = vpop.permute.xlu0 %406
    %409 = vset.pattern.permute.xlu0 1
    %410 = vperm.xlu0 %409, %v86
    %v411 = vpop.permute.xlu0 %410
    %v413 = vmul.f32 %v399, %v383
    %v414 = vmul.f32 %v403, %v386
    %v415 = vmul.f32 %v407, %v391
    %v416 = vmul.f32 %v411, %v394
    %v417 = vrot.slane %v83, 1
    %418 = vrot.lane.b32.xlu0 %v417, 112
    %v419 = vpop.permute.xlu0 %418
    %s420 = vtos %v419
    %v421 = vstv %s420
    %v423 = vadd.f32 %v413, %v421
    %v424 = vadd.f32 %v414, %v421
    %v425 = vadd.f32 %v415, %v421
    %v426 = vadd.f32 %v416, %v421
    %v427 = vmul.f32 %v423, 0.5
    %v428 = vmul.f32 %v424, 0.5
    %v429 = vmul.f32 %v425, 0.5
    %v430 = vmul.f32 %v426, 0.5
    %v431 = vmul.f32 %v423, 0.044715
    %v432 = vmul.f32 %v424, 0.044715
    %v433 = vmul.f32 %v425, 0.044715
    %v434 = vmul.f32 %v426, 0.044715
    %v435 = vmul.f32 %v431, %v423
    %v436 = vmul.f32 %v432, %v424
    %v437 = vmul.f32 %v433, %v425
    %v438 = vmul.f32 %v434, %v426
    %v439 = vmul.f32 %v435, %v423
    %v440 = vmul.f32 %v436, %v424
    %v441 = vmul.f32 %v437, %v425
    %v442 = vmul.f32 %v438, %v426
    %v443 = vadd.f32 %v423, %v439
    %v444 = vadd.f32 %v424, %v440
    %v445 = vadd.f32 %v425, %v441
    %v446 = vadd.f32 %v426, %v442
    %v447 = vmul.f32 %v443, 0.7978846
    %v448 = vmul.f32 %v444, 0.7978846
    %v449 = vmul.f32 %v445, 0.7978846
    %v450 = vmul.f32 %v446, 0.7978846
    %v451 = vtanh.pop %v447
    %v452 = vtanh.pop %v448
    %v453 = vtanh.pop %v449
    %v454 = vtanh.pop %v450
    %v455 = vadd.f32 %v451, 1.0
    %v456 = vadd.f32 %v452, 1.0
    %v457 = vadd.f32 %v453, 1.0
    %v458 = vadd.f32 %v454, 1.0
    %v459 = vmul.f32 %v427, %v455
    %v460 = vmul.f32 %v428, %v456
    %v461 = vmul.f32 %v429, %v457
    %v462 = vmul.f32 %v430, %v458
    %v463 = vadd.f32 %v459, %v460
    %v464 = vrot.slane %v463, 4
    %v465 = vadd.f32 %v463, %v464
    %v466 = vrot.slane %v465, 2
    %v467 = vadd.f32 %v465, %v466
    %v468 = vrot.slane %v467, 1
    %v469 = vadd.f32 %v467, %v468
    %v470 = vadd.f32 %v461, %v462
    %v471 = vrot.slane %v470, 4
    %v472 = vadd.f32 %v470, %v471
    %v473 = vrot.slane %v472, 2
    %v474 = vadd.f32 %v472, %v473
    %v475 = vrot.slane %v474, 1
    %v476 = vadd.f32 %v474, %v475
    %s477 = scalar_lea.vmem [#allocation5], 128
    %v478 = vld [vmem:[%s477] sm:$0xf]
    %v479 = vld [vmem:[%s477 + $0x4] sm:$0xf]
    %v480 = vld [vmem:[%s477 + $0x8] sm:$0xf]
    %v481 = vld [vmem:[%s477 + $0xc] sm:$0xf]
    %v482 = vld [vmem:[%s477 + $0x10] sm:$0xf]
    %v483 = vld [vmem:[%s477 + $0x14] sm:$0xf]
    %v484 = vld [vmem:[%s477 + $0x18] sm:$0xf]
    %v485 = vld [vmem:[%s477 + $0x1c] sm:$0xf]
    %v486 = vld [vmem:[%s477 + $0x20] sm:$0xf]
    %v487 = vld [vmem:[%s477 + $0x24] sm:$0xf]
    %v488 = vld [vmem:[%s477 + $0x28] sm:$0xf]
    %v489 = vld [vmem:[%s477 + $0x2c] sm:$0xf]
    %v490 = vld [vmem:[%s477 + $0x30] sm:$0xf]
    %v491 = vld [vmem:[%s477 + $0x34] sm:$0xf]
    %v492 = vld [vmem:[%s477 + $0x38] sm:$0xf]
    %v493 = vld [vmem:[%s477 + $0x3c] sm:$0xf]
    %v510 = vunpack.c.l.b16 %v478
    %v511 = vunpack.c.l.b16 %v479
    %v512 = vunpack.c.l.b16 %v480
    %v513 = vunpack.c.l.b16 %v481
    %v514 = vunpack.c.l.b16 %v482
    %v515 = vunpack.c.l.b16 %v483
    %v516 = vunpack.c.l.b16 %v484
    %v517 = vunpack.c.l.b16 %v485
    %v518 = vunpack.c.l.b16 %v486
    %v519 = vunpack.c.l.b16 %v487
    %v520 = vunpack.c.l.b16 %v488
    %v521 = vunpack.c.l.b16 %v489
    %v522 = vunpack.c.l.b16 %v490
    %v523 = vunpack.c.l.b16 %v491
    %v524 = vunpack.c.l.b16 %v492
    %v525 = vunpack.c.l.b16 %v493
    %v526 = vpack.c.b16 %v511, %v510
    %v527 = vpack.c.b16 %v513, %v512
    %v528 = vpack.c.b16 %v515, %v514
    %v529 = vpack.c.b16 %v517, %v516
    %v530 = vpack.c.b16 %v519, %v518
    %v531 = vpack.c.b16 %v521, %v520
    %v532 = vpack.c.b16 %v523, %v522
    %v533 = vpack.c.b16 %v525, %v524
    %542 = vmatprep.subr.bf16.mxu0 0
    %543 = vmatpush1.bf16.msra.mxu0 %v533
    %544 = vmatprep.subr.bf16.mxu0 0
    %545 = vmatpush1.bf16.msra.mxu0 %v532
    %546 = vmatprep.subr.bf16.mxu0 0
    %547 = vmatpush1.bf16.msra.mxu0 %v531
    %548 = vmatprep.subr.bf16.mxu0 0
    %549 = vmatpush1.bf16.msra.mxu0 %v530
    %550 = vmatprep.subr.bf16.mxu0 0
    %551 = vmatpush1.bf16.msra.mxu0 %v529
    %552 = vmatprep.subr.bf16.mxu0 0
    %553 = vmatpush1.bf16.msra.mxu0 %v528
    %554 = vmatprep.subr.bf16.mxu0 0
    %555 = vmatpush1.bf16.msra.mxu0 %v527
    %556 = vmatprep.subr.bf16.mxu0 0
    %557 = vmatpush1.bf16.msra.mxu0 %v526
    %558 = vmatprep.subr.bf16.mxu0 0
    %559 = vmatpush2.bf16.msra.mxu0 0
    %560 = vmatprep.subr.bf16.mxu0 0
    %561 = vmatpush2.bf16.msra.mxu0 0
    %562 = vmatprep.subr.bf16.mxu0 0
    %563 = vmatpush2.bf16.msra.mxu0 0
    %564 = vmatprep.subr.bf16.mxu0 0
    %565 = vmatpush2.bf16.msra.mxu0 0
    %566 = vmatprep.subr.bf16.mxu0 0
    %567 = vmatpush2.bf16.msra.mxu0 0
    %568 = vmatprep.subr.bf16.mxu0 0
    %569 = vmatpush2.bf16.msra.mxu0 0
    %570 = vmatprep.subr.bf16.mxu0 0
    %571 = vmatpush2.bf16.msra.mxu0 0
    %572 = vmatprep.subr.bf16.mxu0 0
    %573 = vmatpush2.bf16.msra.mxu0 0
    %574 = vmatprep.mubr.bf16.mxu0 0
    %575 = vmatmul.mubr.bf16.gmra.mxu0 %v81
    %v576 = vpop.f32.mrf.mxu0
    %v577 = vadd.f32 0.0, %v576
    %v578 = vpop.f32.mrf.mxu0
    %v579 = vpop.f32.mrf.mxu0
    %v580 = vadd.f32 0.0, %v579
    %v581 = vpop.f32.mrf.mxu0
    %582 = vmatprep.mubr.bf16.mxu0 0
    %583 = vmatmul.mubr.bf16.gmra.mxu0 %v82
    %v584 = vpop.f32.mrf.mxu0
    %v585 = vadd.f32 0.0, %v584
    %v586 = vpop.f32.mrf.mxu0
    %v587 = vpop.f32.mrf.mxu0
    %v588 = vadd.f32 0.0, %v587
    %v589 = vpop.f32.mrf.mxu0
    %590 = vdwg.mxu0
    %591 = vset.pattern.permute.xlu0 2
    %592 = vperm.xlu0 %591, %v83
    %v593 = vpop.permute.xlu0 %592
    %595 = vset.pattern.permute.xlu0 2
    %596 = vperm.xlu0 %595, %v84
    %v597 = vpop.permute.xlu0 %596
    %599 = vset.pattern.permute.xlu0 2
    %600 = vperm.xlu0 %599, %v85
    %v601 = vpop.permute.xlu0 %600
    %603 = vset.pattern.permute.xlu0 2
    %604 = vperm.xlu0 %603, %v86
    %v605 = vpop.permute.xlu0 %604
    %v607 = vmul.f32 %v593, %v577
    %v608 = vmul.f32 %v597, %v580
    %v609 = vmul.f32 %v601, %v585
    %v610 = vmul.f32 %v605, %v588
    %v611 = vrot.slane %v83, 2
    %612 = vrot.lane.b32.xlu0 %v611, 112
    %v613 = vpop.permute.xlu0 %612
    %s614 = vtos %v613
    %v615 = vstv %s614
    %v617 = vadd.f32 %v607, %v615
    %v618 = vadd.f32 %v608, %v615
    %v619 = vadd.f32 %v609, %v615
    %v620 = vadd.f32 %v610, %v615
    %v621 = vmul.f32 %v617, 0.5
    %v622 = vmul.f32 %v618, 0.5
    %v623 = vmul.f32 %v619, 0.5
    %v624 = vmul.f32 %v620, 0.5
    %v625 = vmul.f32 %v617, 0.044715
    %v626 = vmul.f32 %v618, 0.044715
    %v627 = vmul.f32 %v619, 0.044715
    %v628 = vmul.f32 %v620, 0.044715
    %v629 = vmul.f32 %v625, %v617
    %v630 = vmul.f32 %v626, %v618
    %v631 = vmul.f32 %v627, %v619
    %v632 = vmul.f32 %v628, %v620
    %v633 = vmul.f32 %v629, %v617
    %v634 = vmul.f32 %v630, %v618
    %v635 = vmul.f32 %v631, %v619
    %v636 = vmul.f32 %v632, %v620
    %v637 = vadd.f32 %v617, %v633
    %v638 = vadd.f32 %v618, %v634
    %v639 = vadd.f32 %v619, %v635
    %v640 = vadd.f32 %v620, %v636
    %v641 = vmul.f32 %v637, 0.7978846
    %v642 = vmul.f32 %v638, 0.7978846
    %v643 = vmul.f32 %v639, 0.7978846
    %v644 = vmul.f32 %v640, 0.7978846
    %v645 = vtanh.pop %v641
    %v646 = vtanh.pop %v642
    %v647 = vtanh.pop %v643
    %v648 = vtanh.pop %v644
    %v649 = vadd.f32 %v645, 1.0
    %v650 = vadd.f32 %v646, 1.0
    %v651 = vadd.f32 %v647, 1.0
    %v652 = vadd.f32 %v648, 1.0
    %v653 = vmul.f32 %v621, %v649
    %v654 = vmul.f32 %v622, %v650
    %v655 = vmul.f32 %v623, %v651
    %v656 = vmul.f32 %v624, %v652
    %v657 = vadd.f32 %v653, %v654
    %v658 = vrot.slane %v657, 4
    %v659 = vadd.f32 %v657, %v658
    %v660 = vrot.slane %v659, 2
    %v661 = vadd.f32 %v659, %v660
    %v662 = vrot.slane %v661, 1
    %v663 = vadd.f32 %v661, %v662
    %v664 = vadd.f32 %v655, %v656
    %v665 = vrot.slane %v664, 4
    %v666 = vadd.f32 %v664, %v665
    %v667 = vrot.slane %v666, 2
    %v668 = vadd.f32 %v666, %v667
    %v669 = vrot.slane %v668, 1
    %v670 = vadd.f32 %v668, %v669
    %s671 = scalar_lea.vmem [#allocation5], 192
    %v672 = vld [vmem:[%s671] sm:$0xf]
    %v673 = vld [vmem:[%s671 + $0x4] sm:$0xf]
    %v674 = vld [vmem:[%s671 + $0x8] sm:$0xf]
    %v675 = vld [vmem:[%s671 + $0xc] sm:$0xf]
    %v676 = vld [vmem:[%s671 + $0x10] sm:$0xf]
    %v677 = vld [vmem:[%s671 + $0x14] sm:$0xf]
    %v678 = vld [vmem:[%s671 + $0x18] sm:$0xf]
    %v679 = vld [vmem:[%s671 + $0x1c] sm:$0xf]
    %v680 = vld [vmem:[%s671 + $0x20] sm:$0xf]
    %v681 = vld [vmem:[%s671 + $0x24] sm:$0xf]
    %v682 = vld [vmem:[%s671 + $0x28] sm:$0xf]
    %v683 = vld [vmem:[%s671 + $0x2c] sm:$0xf]
    %v684 = vld [vmem:[%s671 + $0x30] sm:$0xf]
    %v685 = vld [vmem:[%s671 + $0x34] sm:$0xf]
    %v686 = vld [vmem:[%s671 + $0x38] sm:$0xf]
    %v687 = vld [vmem:[%s671 + $0x3c] sm:$0xf]
    %v704 = vunpack.c.l.b16 %v672
    %v705 = vunpack.c.l.b16 %v673
    %v706 = vunpack.c.l.b16 %v674
    %v707 = vunpack.c.l.b16 %v675
    %v708 = vunpack.c.l.b16 %v676
    %v709 = vunpack.c.l.b16 %v677
    %v710 = vunpack.c.l.b16 %v678
    %v711 = vunpack.c.l.b16 %v679
    %v712 = vunpack.c.l.b16 %v680
    %v713 = vunpack.c.l.b16 %v681
    %v714 = vunpack.c.l.b16 %v682
    %v715 = vunpack.c.l.b16 %v683
    %v716 = vunpack.c.l.b16 %v684
    %v717 = vunpack.c.l.b16 %v685
    %v718 = vunpack.c.l.b16 %v686
    %v719 = vunpack.c.l.b16 %v687
    %v720 = vpack.c.b16 %v705, %v704
    %v721 = vpack.c.b16 %v707, %v706
    %v722 = vpack.c.b16 %v709, %v708
    %v723 = vpack.c.b16 %v711, %v710
    %v724 = vpack.c.b16 %v713, %v712
    %v725 = vpack.c.b16 %v715, %v714
    %v726 = vpack.c.b16 %v717, %v716
    %v727 = vpack.c.b16 %v719, %v718
    %736 = vmatprep.subr.bf16.mxu0 0
    %737 = vmatpush1.bf16.msra.mxu0 %v727
    %738 = vmatprep.subr.bf16.mxu0 0
    %739 = vmatpush1.bf16.msra.mxu0 %v726
    %740 = vmatprep.subr.bf16.mxu0 0
    %741 = vmatpush1.bf16.msra.mxu0 %v725
    %742 = vmatprep.subr.bf16.mxu0 0
    %743 = vmatpush1.bf16.msra.mxu0 %v724
    %744 = vmatprep.subr.bf16.mxu0 0
    %745 = vmatpush1.bf16.msra.mxu0 %v723
    %746 = vmatprep.subr.bf16.mxu0 0
    %747 = vmatpush1.bf16.msra.mxu0 %v722
    %748 = vmatprep.subr.bf16.mxu0 0
    %749 = vmatpush1.bf16.msra.mxu0 %v721
    %750 = vmatprep.subr.bf16.mxu0 0
    %751 = vmatpush1.bf16.msra.mxu0 %v720
    %752 = vmatprep.subr.bf16.mxu0 0
    %753 = vmatpush2.bf16.msra.mxu0 0
    %754 = vmatprep.subr.bf16.mxu0 0
    %755 = vmatpush2.bf16.msra.mxu0 0
    %756 = vmatprep.subr.bf16.mxu0 0
    %757 = vmatpush2.bf16.msra.mxu0 0
    %758 = vmatprep.subr.bf16.mxu0 0
    %759 = vmatpush2.bf16.msra.mxu0 0
    %760 = vmatprep.subr.bf16.mxu0 0
    %761 = vmatpush2.bf16.msra.mxu0 0
    %762 = vmatprep.subr.bf16.mxu0 0
    %763 = vmatpush2.bf16.msra.mxu0 0
    %764 = vmatprep.subr.bf16.mxu0 0
    %765 = vmatpush2.bf16.msra.mxu0 0
    %766 = vmatprep.subr.bf16.mxu0 0
    %767 = vmatpush2.bf16.msra.mxu0 0
    %768 = vmatprep.mubr.bf16.mxu0 0
    %769 = vmatmul.mubr.bf16.gmra.mxu0 %v81
    %v770 = vpop.f32.mrf.mxu0
    %v771 = vadd.f32 0.0, %v770
    %v772 = vpop.f32.mrf.mxu0
    %v773 = vpop.f32.mrf.mxu0
    %v774 = vadd.f32 0.0, %v773
    %v775 = vpop.f32.mrf.mxu0
    %776 = vmatprep.mubr.bf16.mxu0 0
    %777 = vmatmul.mubr.bf16.gmra.mxu0 %v82
    %v778 = vpop.f32.mrf.mxu0
    %v779 = vadd.f32 0.0, %v778
    %v780 = vpop.f32.mrf.mxu0
    %v781 = vpop.f32.mrf.mxu0
    %v782 = vadd.f32 0.0, %v781
    %v783 = vpop.f32.mrf.mxu0
    %784 = vdwg.mxu0
    %785 = vset.pattern.permute.xlu0 3
    %786 = vperm.xlu0 %785, %v83
    %v787 = vpop.permute.xlu0 %786
    %789 = vset.pattern.permute.xlu0 3
    %790 = vperm.xlu0 %789, %v84
    %v791 = vpop.permute.xlu0 %790
    %793 = vset.pattern.permute.xlu0 3
    %794 = vperm.xlu0 %793, %v85
    %v795 = vpop.permute.xlu0 %794
    %797 = vset.pattern.permute.xlu0 3
    %798 = vperm.xlu0 %797, %v86
    %v799 = vpop.permute.xlu0 %798
    %v801 = vmul.f32 %v787, %v771
    %v802 = vmul.f32 %v791, %v774
    %v803 = vmul.f32 %v795, %v779
    %v804 = vmul.f32 %v799, %v782
    %v805 = vrot.slane %v83, 3
    %806 = vrot.lane.b32.xlu0 %v805, 112
    %v807 = vpop.permute.xlu0 %806
    %s808 = vtos %v807
    %v809 = vstv %s808
    %v811 = vadd.f32 %v801, %v809
    %v812 = vadd.f32 %v802, %v809
    %v813 = vadd.f32 %v803, %v809
    %v814 = vadd.f32 %v804, %v809
    %v815 = vmul.f32 %v811, 0.5
    %v816 = vmul.f32 %v812, 0.5
    %v817 = vmul.f32 %v813, 0.5
    %v818 = vmul.f32 %v814, 0.5
    %v819 = vmul.f32 %v811, 0.044715
    %v820 = vmul.f32 %v812, 0.044715
    %v821 = vmul.f32 %v813, 0.044715
    %v822 = vmul.f32 %v814, 0.044715
    %v823 = vmul.f32 %v819, %v811
    %v824 = vmul.f32 %v820, %v812
    %v825 = vmul.f32 %v821, %v813
    %v826 = vmul.f32 %v822, %v814
    %v827 = vmul.f32 %v823, %v811
    %v828 = vmul.f32 %v824, %v812
    %v829 = vmul.f32 %v825, %v813
    %v830 = vmul.f32 %v826, %v814
    %v831 = vadd.f32 %v811, %v827
    %v832 = vadd.f32 %v812, %v828
    %v833 = vadd.f32 %v813, %v829
    %v834 = vadd.f32 %v814, %v830
    %v835 = vmul.f32 %v831, 0.7978846
    %v836 = vmul.f32 %v832, 0.7978846
    %v837 = vmul.f32 %v833, 0.7978846
    %v838 = vmul.f32 %v834, 0.7978846
    %v839 = vtanh.pop %v835
    %v840 = vtanh.pop %v836
    %v841 = vtanh.pop %v837
    %v842 = vtanh.pop %v838
    %v843 = vadd.f32 %v839, 1.0
    %v844 = vadd.f32 %v840, 1.0
    %v845 = vadd.f32 %v841, 1.0
    %v846 = vadd.f32 %v842, 1.0
    %v847 = vmul.f32 %v815, %v843
    %v848 = vmul.f32 %v816, %v844
    %v849 = vmul.f32 %v817, %v845
    %v850 = vmul.f32 %v818, %v846
    %v851 = vadd.f32 %v847, %v848
    %v852 = vrot.slane %v851, 4
    %v853 = vadd.f32 %v851, %v852
    %v854 = vrot.slane %v853, 2
    %v855 = vadd.f32 %v853, %v854
    %v856 = vrot.slane %v855, 1
    %v857 = vadd.f32 %v855, %v856
    %v858 = vadd.f32 %v849, %v850
    %v859 = vrot.slane %v858, 4
    %v860 = vadd.f32 %v858, %v859
    %v861 = vrot.slane %v860, 2
    %v862 = vadd.f32 %v860, %v861
    %v863 = vrot.slane %v862, 1
    %v864 = vadd.f32 %v862, %v863
    %s865 = scalar_lea.vmem [#allocation5], 256
    %v866 = vld [vmem:[%s865] sm:$0xf]
    %v867 = vld [vmem:[%s865 + $0x4] sm:$0xf]
    %v868 = vld [vmem:[%s865 + $0x8] sm:$0xf]
    %v869 = vld [vmem:[%s865 + $0xc] sm:$0xf]
    %v870 = vld [vmem:[%s865 + $0x10] sm:$0xf]
    %v871 = vld [vmem:[%s865 + $0x14] sm:$0xf]
    %v872 = vld [vmem:[%s865 + $0x18] sm:$0xf]
    %v873 = vld [vmem:[%s865 + $0x1c] sm:$0xf]
    %v874 = vld [vmem:[%s865 + $0x20] sm:$0xf]
    %v875 = vld [vmem:[%s865 + $0x24] sm:$0xf]
    %v876 = vld [vmem:[%s865 + $0x28] sm:$0xf]
    %v877 = vld [vmem:[%s865 + $0x2c] sm:$0xf]
    %v878 = vld [vmem:[%s865 + $0x30] sm:$0xf]
    %v879 = vld [vmem:[%s865 + $0x34] sm:$0xf]
    %v880 = vld [vmem:[%s865 + $0x38] sm:$0xf]
    %v881 = vld [vmem:[%s865 + $0x3c] sm:$0xf]
    %v898 = vunpack.c.l.b16 %v866
    %v899 = vunpack.c.l.b16 %v867
    %v900 = vunpack.c.l.b16 %v868
    %v901 = vunpack.c.l.b16 %v869
    %v902 = vunpack.c.l.b16 %v870
    %v903 = vunpack.c.l.b16 %v871
    %v904 = vunpack.c.l.b16 %v872
    %v905 = vunpack.c.l.b16 %v873
    %v906 = vunpack.c.l.b16 %v874
    %v907 = vunpack.c.l.b16 %v875
    %v908 = vunpack.c.l.b16 %v876
    %v909 = vunpack.c.l.b16 %v877
    %v910 = vunpack.c.l.b16 %v878
    %v911 = vunpack.c.l.b16 %v879
    %v912 = vunpack.c.l.b16 %v880
    %v913 = vunpack.c.l.b16 %v881
    %v914 = vpack.c.b16 %v899, %v898
    %v915 = vpack.c.b16 %v901, %v900
    %v916 = vpack.c.b16 %v903, %v902
    %v917 = vpack.c.b16 %v905, %v904
    %v918 = vpack.c.b16 %v907, %v906
    %v919 = vpack.c.b16 %v909, %v908
    %v920 = vpack.c.b16 %v911, %v910
    %v921 = vpack.c.b16 %v913, %v912
    %930 = vmatprep.subr.bf16.mxu0 0
    %931 = vmatpush1.bf16.msra.mxu0 %v921
    %932 = vmatprep.subr.bf16.mxu0 0
    %933 = vmatpush1.bf16.msra.mxu0 %v920
    %934 = vmatprep.subr.bf16.mxu0 0
    %935 = vmatpush1.bf16.msra.mxu0 %v919
    %936 = vmatprep.subr.bf16.mxu0 0
    %937 = vmatpush1.bf16.msra.mxu0 %v918
    %938 = vmatprep.subr.bf16.mxu0 0
    %939 = vmatpush1.bf16.msra.mxu0 %v917
    %940 = vmatprep.subr.bf16.mxu0 0
    %941 = vmatpush1.bf16.msra.mxu0 %v916
    %942 = vmatprep.subr.bf16.mxu0 0
    %943 = vmatpush1.bf16.msra.mxu0 %v915
    %944 = vmatprep.subr.bf16.mxu0 0
    %945 = vmatpush1.bf16.msra.mxu0 %v914
    %946 = vmatprep.subr.bf16.mxu0 0
    %947 = vmatpush2.bf16.msra.mxu0 0
    %948 = vmatprep.subr.bf16.mxu0 0
    %949 = vmatpush2.bf16.msra.mxu0 0
    %950 = vmatprep.subr.bf16.mxu0 0
    %951 = vmatpush2.bf16.msra.mxu0 0
    %952 = vmatprep.subr.bf16.mxu0 0
    %953 = vmatpush2.bf16.msra.mxu0 0
    %954 = vmatprep.subr.bf16.mxu0 0
    %955 = vmatpush2.bf16.msra.mxu0 0
    %956 = vmatprep.subr.bf16.mxu0 0
    %957 = vmatpush2.bf16.msra.mxu0 0
    %958 = vmatprep.subr.bf16.mxu0 0
    %959 = vmatpush2.bf16.msra.mxu0 0
    %960 = vmatprep.subr.bf16.mxu0 0
    %961 = vmatpush2.bf16.msra.mxu0 0
    %962 = vmatprep.mubr.bf16.mxu0 0
    %963 = vmatmul.mubr.bf16.gmra.mxu0 %v81
    %v964 = vpop.f32.mrf.mxu0
    %v965 = vadd.f32 0.0, %v964
    %v966 = vpop.f32.mrf.mxu0
    %v967 = vpop.f32.mrf.mxu0
    %v968 = vadd.f32 0.0, %v967
    %v969 = vpop.f32.mrf.mxu0
    %970 = vmatprep.mubr.bf16.mxu0 0
    %971 = vmatmul.mubr.bf16.gmra.mxu0 %v82
    %v972 = vpop.f32.mrf.mxu0
    %v973 = vadd.f32 0.0, %v972
    %v974 = vpop.f32.mrf.mxu0
    %v975 = vpop.f32.mrf.mxu0
    %v976 = vadd.f32 0.0, %v975
    %v977 = vpop.f32.mrf.mxu0
    %978 = vdwg.mxu0
    %979 = vset.pattern.permute.xlu0 4
    %980 = vperm.xlu0 %979, %v83
    %v981 = vpop.permute.xlu0 %980
    %983 = vset.pattern.permute.xlu0 4
    %984 = vperm.xlu0 %983, %v84
    %v985 = vpop.permute.xlu0 %984
    %987 = vset.pattern.permute.xlu0 4
    %988 = vperm.xlu0 %987, %v85
    %v989 = vpop.permute.xlu0 %988
    %991 = vset.pattern.permute.xlu0 4
    %992 = vperm.xlu0 %991, %v86
    %v993 = vpop.permute.xlu0 %992
    %v995 = vmul.f32 %v981, %v965
    %v996 = vmul.f32 %v985, %v968
    %v997 = vmul.f32 %v989, %v973
    %v998 = vmul.f32 %v993, %v976
    %v999 = vrot.slane %v83, 4
    %1000 = vrot.lane.b32.xlu0 %v999, 112
    %v1001 = vpop.permute.xlu0 %1000
    %s1002 = vtos %v1001
    %v1003 = vstv %s1002
    %v1005 = vadd.f32 %v995, %v1003
    %v1006 = vadd.f32 %v996, %v1003
    %v1007 = vadd.f32 %v997, %v1003
    %v1008 = vadd.f32 %v998, %v1003
    %v1009 = vmul.f32 %v1005, 0.5
    %v1010 = vmul.f32 %v1006, 0.5
    %v1011 = vmul.f32 %v1007, 0.5
    %v1012 = vmul.f32 %v1008, 0.5
    %v1013 = vmul.f32 %v1005, 0.044715
    %v1014 = vmul.f32 %v1006, 0.044715
    %v1015 = vmul.f32 %v1007, 0.044715
    %v1016 = vmul.f32 %v1008, 0.044715
    %v1017 = vmul.f32 %v1013, %v1005
    %v1018 = vmul.f32 %v1014, %v1006
    %v1019 = vmul.f32 %v1015, %v1007
    %v1020 = vmul.f32 %v1016, %v1008
    %v1021 = vmul.f32 %v1017, %v1005
    %v1022 = vmul.f32 %v1018, %v1006
    %v1023 = vmul.f32 %v1019, %v1007
    %v1024 = vmul.f32 %v1020, %v1008
    %v1025 = vadd.f32 %v1005, %v1021
    %v1026 = vadd.f32 %v1006, %v1022
    %v1027 = vadd.f32 %v1007, %v1023
    %v1028 = vadd.f32 %v1008, %v1024
    %v1029 = vmul.f32 %v1025, 0.7978846
    %v1030 = vmul.f32 %v1026, 0.7978846
    %v1031 = vmul.f32 %v1027, 0.7978846
    %v1032 = vmul.f32 %v1028, 0.7978846
    %v1033 = vtanh.pop %v1029
    %v1034 = vtanh.pop %v1030
    %v1035 = vtanh.pop %v1031
    %v1036 = vtanh.pop %v1032
    %v1037 = vadd.f32 %v1033, 1.0
    %v1038 = vadd.f32 %v1034, 1.0
    %v1039 = vadd.f32 %v1035, 1.0
    %v1040 = vadd.f32 %v1036, 1.0
    %v1041 = vmul.f32 %v1009, %v1037
    %v1042 = vmul.f32 %v1010, %v1038
    %v1043 = vmul.f32 %v1011, %v1039
    %v1044 = vmul.f32 %v1012, %v1040
    %v1045 = vadd.f32 %v1041, %v1042
    %v1046 = vrot.slane %v1045, 4
    %v1047 = vadd.f32 %v1045, %v1046
    %v1048 = vrot.slane %v1047, 2
    %v1049 = vadd.f32 %v1047, %v1048
    %v1050 = vrot.slane %v1049, 1
    %v1051 = vadd.f32 %v1049, %v1050
    %v1052 = vadd.f32 %v1043, %v1044
    %v1053 = vrot.slane %v1052, 4
    %v1054 = vadd.f32 %v1052, %v1053
    %v1055 = vrot.slane %v1054, 2
    %v1056 = vadd.f32 %v1054, %v1055
    %v1057 = vrot.slane %v1056, 1
    %v1058 = vadd.f32 %v1056, %v1057
    %s1059 = scalar_lea.vmem [#allocation5], 320
    %v1060 = vld [vmem:[%s1059] sm:$0xf]
    %v1061 = vld [vmem:[%s1059 + $0x4] sm:$0xf]
    %v1062 = vld [vmem:[%s1059 + $0x8] sm:$0xf]
    %v1063 = vld [vmem:[%s1059 + $0xc] sm:$0xf]
    %v1064 = vld [vmem:[%s1059 + $0x10] sm:$0xf]
    %v1065 = vld [vmem:[%s1059 + $0x14] sm:$0xf]
    %v1066 = vld [vmem:[%s1059 + $0x18] sm:$0xf]
    %v1067 = vld [vmem:[%s1059 + $0x1c] sm:$0xf]
    %v1068 = vld [vmem:[%s1059 + $0x20] sm:$0xf]
    %v1069 = vld [vmem:[%s1059 + $0x24] sm:$0xf]
    %v1070 = vld [vmem:[%s1059 + $0x28] sm:$0xf]
    %v1071 = vld [vmem:[%s1059 + $0x2c] sm:$0xf]
    %v1072 = vld [vmem:[%s1059 + $0x30] sm:$0xf]
    %v1073 = vld [vmem:[%s1059 + $0x34] sm:$0xf]
    %v1074 = vld [vmem:[%s1059 + $0x38] sm:$0xf]
    %v1075 = vld [vmem:[%s1059 + $0x3c] sm:$0xf]
    %v1092 = vunpack.c.l.b16 %v1060
    %v1093 = vunpack.c.l.b16 %v1061
    %v1094 = vunpack.c.l.b16 %v1062
    %v1095 = vunpack.c.l.b16 %v1063
    %v1096 = vunpack.c.l.b16 %v1064
    %v1097 = vunpack.c.l.b16 %v1065
    %v1098 = vunpack.c.l.b16 %v1066
    %v1099 = vunpack.c.l.b16 %v1067
    %v1100 = vunpack.c.l.b16 %v1068
    %v1101 = vunpack.c.l.b16 %v1069
    %v1102 = vunpack.c.l.b16 %v1070
    %v1103 = vunpack.c.l.b16 %v1071
    %v1104 = vunpack.c.l.b16 %v1072
    %v1105 = vunpack.c.l.b16 %v1073
    %v1106 = vunpack.c.l.b16 %v1074
    %v1107 = vunpack.c.l.b16 %v1075
    %v1108 = vpack.c.b16 %v1093, %v1092
    %v1109 = vpack.c.b16 %v1095, %v1094
    %v1110 = vpack.c.b16 %v1097, %v1096
    %v1111 = vpack.c.b16 %v1099, %v1098
    %v1112 = vpack.c.b16 %v1101, %v1100
    %v1113 = vpack.c.b16 %v1103, %v1102
    %v1114 = vpack.c.b16 %v1105, %v1104
    %v1115 = vpack.c.b16 %v1107, %v1106
    %1124 = vmatprep.subr.bf16.mxu0 0
    %1125 = vmatpush1.bf16.msra.mxu0 %v1115
    %1126 = vmatprep.subr.bf16.mxu0 0
    %1127 = vmatpush1.bf16.msra.mxu0 %v1114
    %1128 = vmatprep.subr.bf16.mxu0 0
    %1129 = vmatpush1.bf16.msra.mxu0 %v1113
    %1130 = vmatprep.subr.bf16.mxu0 0
    %1131 = vmatpush1.bf16.msra.mxu0 %v1112
    %1132 = vmatprep.subr.bf16.mxu0 0
    %1133 = vmatpush1.bf16.msra.mxu0 %v1111
    %1134 = vmatprep.subr.bf16.mxu0 0
    %1135 = vmatpush1.bf16.msra.mxu0 %v1110
    %1136 = vmatprep.subr.bf16.mxu0 0
    %1137 = vmatpush1.bf16.msra.mxu0 %v1109
    %1138 = vmatprep.subr.bf16.mxu0 0
    %1139 = vmatpush1.bf16.msra.mxu0 %v1108
    %1140 = vmatprep.subr.bf16.mxu0 0
    %1141 = vmatpush2.bf16.msra.mxu0 0
    %1142 = vmatprep.subr.bf16.mxu0 0
    %1143 = vmatpush2.bf16.msra.mxu0 0
    %1144 = vmatprep.subr.bf16.mxu0 0
    %1145 = vmatpush2.bf16.msra.mxu0 0
    %1146 = vmatprep.subr.bf16.mxu0 0
    %1147 = vmatpush2.bf16.msra.mxu0 0
    %1148 = vmatprep.subr.bf16.mxu0 0
    %1149 = vmatpush2.bf16.msra.mxu0 0
    %1150 = vmatprep.subr.bf16.mxu0 0
    %1151 = vmatpush2.bf16.msra.mxu0 0
    %1152 = vmatprep.subr.bf16.mxu0 0
    %1153 = vmatpush2.bf16.msra.mxu0 0
    %1154 = vmatprep.subr.bf16.mxu0 0
    %1155 = vmatpush2.bf16.msra.mxu0 0
    %1156 = vmatprep.mubr.bf16.mxu0 0
    %1157 = vmatmul.mubr.bf16.gmra.mxu0 %v81
    %v1158 = vpop.f32.mrf.mxu0
    %v1159 = vadd.f32 0.0, %v1158
    %v1160 = vpop.f32.mrf.mxu0
    %v1161 = vpop.f32.mrf.mxu0
    %v1162 = vadd.f32 0.0, %v1161
    %v1163 = vpop.f32.mrf.mxu0
    %1164 = vmatprep.mubr.bf16.mxu0 0
    %1165 = vmatmul.mubr.bf16.gmra.mxu0 %v82
    %v1166 = vpop.f32.mrf.mxu0
    %v1167 = vadd.f32 0.0, %v1166
    %v1168 = vpop.f32.mrf.mxu0
    %v1169 = vpop.f32.mrf.mxu0
    %v1170 = vadd.f32 0.0, %v1169
    %v1171 = vpop.f32.mrf.mxu0
    %1172 = vdwg.mxu0
    %1173 = vset.pattern.permute.xlu0 5
    %1174 = vperm.xlu0 %1173, %v83
    %v1175 = vpop.permute.xlu0 %1174
    %1177 = vset.pattern.permute.xlu0 5
    %1178 = vperm.xlu0 %1177, %v84
    %v1179 = vpop.permute.xlu0 %1178
    %1181 = vset.pattern.permute.xlu0 5
    %1182 = vperm.xlu0 %1181, %v85
    %v1183 = vpop.permute.xlu0 %1182
    %1185 = vset.pattern.permute.xlu0 5
    %1186 = vperm.xlu0 %1185, %v86
    %v1187 = vpop.permute.xlu0 %1186
    %v1189 = vmul.f32 %v1175, %v1159
    %v1190 = vmul.f32 %v1179, %v1162
    %v1191 = vmul.f32 %v1183, %v1167
    %v1192 = vmul.f32 %v1187, %v1170
    %v1193 = vrot.slane %v83, 5
    %1194 = vrot.lane.b32.xlu0 %v1193, 112
    %v1195 = vpop.permute.xlu0 %1194
    %s1196 = vtos %v1195
    %v1197 = vstv %s1196
    %v1199 = vadd.f32 %v1189, %v1197
    %v1200 = vadd.f32 %v1190, %v1197
    %v1201 = vadd.f32 %v1191, %v1197
    %v1202 = vadd.f32 %v1192, %v1197
    %v1203 = vmul.f32 %v1199, 0.5
    %v1204 = vmul.f32 %v1200, 0.5
    %v1205 = vmul.f32 %v1201, 0.5
    %v1206 = vmul.f32 %v1202, 0.5
    %v1207 = vmul.f32 %v1199, 0.044715
    %v1208 = vmul.f32 %v1200, 0.044715
    %v1209 = vmul.f32 %v1201, 0.044715
    %v1210 = vmul.f32 %v1202, 0.044715
    %v1211 = vmul.f32 %v1207, %v1199
    %v1212 = vmul.f32 %v1208, %v1200
    %v1213 = vmul.f32 %v1209, %v1201
    %v1214 = vmul.f32 %v1210, %v1202
    %v1215 = vmul.f32 %v1211, %v1199
    %v1216 = vmul.f32 %v1212, %v1200
    %v1217 = vmul.f32 %v1213, %v1201
    %v1218 = vmul.f32 %v1214, %v1202
    %v1219 = vadd.f32 %v1199, %v1215
    %v1220 = vadd.f32 %v1200, %v1216
    %v1221 = vadd.f32 %v1201, %v1217
    %v1222 = vadd.f32 %v1202, %v1218
    %v1223 = vmul.f32 %v1219, 0.7978846
    %v1224 = vmul.f32 %v1220, 0.7978846
    %v1225 = vmul.f32 %v1221, 0.7978846
    %v1226 = vmul.f32 %v1222, 0.7978846
    %v1227 = vtanh.pop %v1223
    %v1228 = vtanh.pop %v1224
    %v1229 = vtanh.pop %v1225
    %v1230 = vtanh.pop %v1226
    %v1231 = vadd.f32 %v1227, 1.0
    %v1232 = vadd.f32 %v1228, 1.0
    %v1233 = vadd.f32 %v1229, 1.0
    %v1234 = vadd.f32 %v1230, 1.0
    %v1235 = vmul.f32 %v1203, %v1231
    %v1236 = vmul.f32 %v1204, %v1232
    %v1237 = vmul.f32 %v1205, %v1233
    %v1238 = vmul.f32 %v1206, %v1234
    %v1239 = vadd.f32 %v1235, %v1236
    %v1240 = vrot.slane %v1239, 4
    %v1241 = vadd.f32 %v1239, %v1240
    %v1242 = vrot.slane %v1241, 2
    %v1243 = vadd.f32 %v1241, %v1242
    %v1244 = vrot.slane %v1243, 1
    %v1245 = vadd.f32 %v1243, %v1244
    %v1246 = vadd.f32 %v1237, %v1238
    %v1247 = vrot.slane %v1246, 4
    %v1248 = vadd.f32 %v1246, %v1247
    %v1249 = vrot.slane %v1248, 2
    %v1250 = vadd.f32 %v1248, %v1249
    %v1251 = vrot.slane %v1250, 1
    %v1252 = vadd.f32 %v1250, %v1251
    %s1253 = scalar_lea.vmem [#allocation5], 384
    %v1254 = vld [vmem:[%s1253] sm:$0xf]
    %v1255 = vld [vmem:[%s1253 + $0x4] sm:$0xf]
    %v1256 = vld [vmem:[%s1253 + $0x8] sm:$0xf]
    %v1257 = vld [vmem:[%s1253 + $0xc] sm:$0xf]
    %v1258 = vld [vmem:[%s1253 + $0x10] sm:$0xf]
    %v1259 = vld [vmem:[%s1253 + $0x14] sm:$0xf]
    %v1260 = vld [vmem:[%s1253 + $0x18] sm:$0xf]
    %v1261 = vld [vmem:[%s1253 + $0x1c] sm:$0xf]
    %v1262 = vld [vmem:[%s1253 + $0x20] sm:$0xf]
    %v1263 = vld [vmem:[%s1253 + $0x24] sm:$0xf]
    %v1264 = vld [vmem:[%s1253 + $0x28] sm:$0xf]
    %v1265 = vld [vmem:[%s1253 + $0x2c] sm:$0xf]
    %v1266 = vld [vmem:[%s1253 + $0x30] sm:$0xf]
    %v1267 = vld [vmem:[%s1253 + $0x34] sm:$0xf]
    %v1268 = vld [vmem:[%s1253 + $0x38] sm:$0xf]
    %v1269 = vld [vmem:[%s1253 + $0x3c] sm:$0xf]
    %v1286 = vunpack.c.l.b16 %v1254
    %v1287 = vunpack.c.l.b16 %v1255
    %v1288 = vunpack.c.l.b16 %v1256
    %v1289 = vunpack.c.l.b16 %v1257
    %v1290 = vunpack.c.l.b16 %v1258
    %v1291 = vunpack.c.l.b16 %v1259
    %v1292 = vunpack.c.l.b16 %v1260
    %v1293 = vunpack.c.l.b16 %v1261
    %v1294 = vunpack.c.l.b16 %v1262
    %v1295 = vunpack.c.l.b16 %v1263
    %v1296 = vunpack.c.l.b16 %v1264
    %v1297 = vunpack.c.l.b16 %v1265
    %v1298 = vunpack.c.l.b16 %v1266
    %v1299 = vunpack.c.l.b16 %v1267
    %v1300 = vunpack.c.l.b16 %v1268
    %v1301 = vunpack.c.l.b16 %v1269
    %v1302 = vpack.c.b16 %v1287, %v1286
    %v1303 = vpack.c.b16 %v1289, %v1288
    %v1304 = vpack.c.b16 %v1291, %v1290
    %v1305 = vpack.c.b16 %v1293, %v1292
    %v1306 = vpack.c.b16 %v1295, %v1294
    %v1307 = vpack.c.b16 %v1297, %v1296
    %v1308 = vpack.c.b16 %v1299, %v1298
    %v1309 = vpack.c.b16 %v1301, %v1300
    %1318 = vmatprep.subr.bf16.mxu0 0
    %1319 = vmatpush1.bf16.msra.mxu0 %v1309
    %1320 = vmatprep.subr.bf16.mxu0 0
    %1321 = vmatpush1.bf16.msra.mxu0 %v1308
    %1322 = vmatprep.subr.bf16.mxu0 0
    %1323 = vmatpush1.bf16.msra.mxu0 %v1307
    %1324 = vmatprep.subr.bf16.mxu0 0
    %1325 = vmatpush1.bf16.msra.mxu0 %v1306
    %1326 = vmatprep.subr.bf16.mxu0 0
    %1327 = vmatpush1.bf16.msra.mxu0 %v1305
    %1328 = vmatprep.subr.bf16.mxu0 0
    %1329 = vmatpush1.bf16.msra.mxu0 %v1304
    %1330 = vmatprep.subr.bf16.mxu0 0
    %1331 = vmatpush1.bf16.msra.mxu0 %v1303
    %1332 = vmatprep.subr.bf16.mxu0 0
    %1333 = vmatpush1.bf16.msra.mxu0 %v1302
    %1334 = vmatprep.subr.bf16.mxu0 0
    %1335 = vmatpush2.bf16.msra.mxu0 0
    %1336 = vmatprep.subr.bf16.mxu0 0
    %1337 = vmatpush2.bf16.msra.mxu0 0
    %1338 = vmatprep.subr.bf16.mxu0 0
    %1339 = vmatpush2.bf16.msra.mxu0 0
    %1340 = vmatprep.subr.bf16.mxu0 0
    %1341 = vmatpush2.bf16.msra.mxu0 0
    %1342 = vmatprep.subr.bf16.mxu0 0
    %1343 = vmatpush2.bf16.msra.mxu0 0
    %1344 = vmatprep.subr.bf16.mxu0 0
    %1345 = vmatpush2.bf16.msra.mxu0 0
    %1346 = vmatprep.subr.bf16.mxu0 0
    %1347 = vmatpush2.bf16.msra.mxu0 0
    %1348 = vmatprep.subr.bf16.mxu0 0
    %1349 = vmatpush2.bf16.msra.mxu0 0
    %1350 = vmatprep.mubr.bf16.mxu0 0
    %1351 = vmatmul.mubr.bf16.gmra.mxu0 %v81
    %v1352 = vpop.f32.mrf.mxu0
    %v1353 = vadd.f32 0.0, %v1352
    %v1354 = vpop.f32.mrf.mxu0
    %v1355 = vpop.f32.mrf.mxu0
    %v1356 = vadd.f32 0.0, %v1355
    %v1357 = vpop.f32.mrf.mxu0
    %1358 = vmatprep.mubr.bf16.mxu0 0
    %1359 = vmatmul.mubr.bf16.gmra.mxu0 %v82
    %v1360 = vpop.f32.mrf.mxu0
    %v1361 = vadd.f32 0.0, %v1360
    %v1362 = vpop.f32.mrf.mxu0
    %v1363 = vpop.f32.mrf.mxu0
    %v1364 = vadd.f32 0.0, %v1363
    %v1365 = vpop.f32.mrf.mxu0
    %1366 = vdwg.mxu0
    %1367 = vset.pattern.permute.xlu0 6
    %1368 = vperm.xlu0 %1367, %v83
    %v1369 = vpop.permute.xlu0 %1368
    %1371 = vset.pattern.permute.xlu0 6
    %1372 = vperm.xlu0 %1371, %v84
    %v1373 = vpop.permute.xlu0 %1372
    %1375 = vset.pattern.permute.xlu0 6
    %1376 = vperm.xlu0 %1375, %v85
    %v1377 = vpop.permute.xlu0 %1376
    %1379 = vset.pattern.permute.xlu0 6
    %1380 = vperm.xlu0 %1379, %v86
    %v1381 = vpop.permute.xlu0 %1380
    %v1383 = vmul.f32 %v1369, %v1353
    %v1384 = vmul.f32 %v1373, %v1356
    %v1385 = vmul.f32 %v1377, %v1361
    %v1386 = vmul.f32 %v1381, %v1364
    %v1387 = vrot.slane %v83, 6
    %1388 = vrot.lane.b32.xlu0 %v1387, 112
    %v1389 = vpop.permute.xlu0 %1388
    %s1390 = vtos %v1389
    %v1391 = vstv %s1390
    %v1393 = vadd.f32 %v1383, %v1391
    %v1394 = vadd.f32 %v1384, %v1391
    %v1395 = vadd.f32 %v1385, %v1391
    %v1396 = vadd.f32 %v1386, %v1391
    %v1397 = vmul.f32 %v1393, 0.5
    %v1398 = vmul.f32 %v1394, 0.5
    %v1399 = vmul.f32 %v1395, 0.5
    %v1400 = vmul.f32 %v1396, 0.5
    %v1401 = vmul.f32 %v1393, 0.044715
    %v1402 = vmul.f32 %v1394, 0.044715
    %v1403 = vmul.f32 %v1395, 0.044715
    %v1404 = vmul.f32 %v1396, 0.044715
    %v1405 = vmul.f32 %v1401, %v1393
    %v1406 = vmul.f32 %v1402, %v1394
    %v1407 = vmul.f32 %v1403, %v1395
    %v1408 = vmul.f32 %v1404, %v1396
    %v1409 = vmul.f32 %v1405, %v1393
    %v1410 = vmul.f32 %v1406, %v1394
    %v1411 = vmul.f32 %v1407, %v1395
    %v1412 = vmul.f32 %v1408, %v1396
    %v1413 = vadd.f32 %v1393, %v1409
    %v1414 = vadd.f32 %v1394, %v1410
    %v1415 = vadd.f32 %v1395, %v1411
    %v1416 = vadd.f32 %v1396, %v1412
    %v1417 = vmul.f32 %v1413, 0.7978846
    %v1418 = vmul.f32 %v1414, 0.7978846
    %v1419 = vmul.f32 %v1415, 0.7978846
    %v1420 = vmul.f32 %v1416, 0.7978846
    %v1421 = vtanh.pop %v1417
    %v1422 = vtanh.pop %v1418
    %v1423 = vtanh.pop %v1419
    %v1424 = vtanh.pop %v1420
    %v1425 = vadd.f32 %v1421, 1.0
    %v1426 = vadd.f32 %v1422, 1.0
    %v1427 = vadd.f32 %v1423, 1.0
    %v1428 = vadd.f32 %v1424, 1.0
    %v1429 = vmul.f32 %v1397, %v1425
    %v1430 = vmul.f32 %v1398, %v1426
    %v1431 = vmul.f32 %v1399, %v1427
    %v1432 = vmul.f32 %v1400, %v1428
    %v1433 = vadd.f32 %v1429, %v1430
    %v1434 = vrot.slane %v1433, 4
    %v1435 = vadd.f32 %v1433, %v1434
    %v1436 = vrot.slane %v1435, 2
    %v1437 = vadd.f32 %v1435, %v1436
    %v1438 = vrot.slane %v1437, 1
    %v1439 = vadd.f32 %v1437, %v1438
    %v1440 = vadd.f32 %v1431, %v1432
    %v1441 = vrot.slane %v1440, 4
    %v1442 = vadd.f32 %v1440, %v1441
    %v1443 = vrot.slane %v1442, 2
    %v1444 = vadd.f32 %v1442, %v1443
    %v1445 = vrot.slane %v1444, 1
    %v1446 = vadd.f32 %v1444, %v1445
    %s1447 = scalar_lea.vmem [#allocation5], 448
    %v1448 = vld [vmem:[%s1447] sm:$0xf]
    %v1449 = vld [vmem:[%s1447 + $0x4] sm:$0xf]
    %v1450 = vld [vmem:[%s1447 + $0x8] sm:$0xf]
    %v1451 = vld [vmem:[%s1447 + $0xc] sm:$0xf]
    %v1452 = vld [vmem:[%s1447 + $0x10] sm:$0xf]
    %v1453 = vld [vmem:[%s1447 + $0x14] sm:$0xf]
    %v1454 = vld [vmem:[%s1447 + $0x18] sm:$0xf]
    %v1455 = vld [vmem:[%s1447 + $0x1c] sm:$0xf]
    %v1456 = vld [vmem:[%s1447 + $0x20] sm:$0xf]
    %v1457 = vld [vmem:[%s1447 + $0x24] sm:$0xf]
    %v1458 = vld [vmem:[%s1447 + $0x28] sm:$0xf]
    %v1459 = vld [vmem:[%s1447 + $0x2c] sm:$0xf]
    %v1460 = vld [vmem:[%s1447 + $0x30] sm:$0xf]
    %v1461 = vld [vmem:[%s1447 + $0x34] sm:$0xf]
    %v1462 = vld [vmem:[%s1447 + $0x38] sm:$0xf]
    %v1463 = vld [vmem:[%s1447 + $0x3c] sm:$0xf]
    %v1480 = vunpack.c.l.b16 %v1448
    %v1481 = vunpack.c.l.b16 %v1449
    %v1482 = vunpack.c.l.b16 %v1450
    %v1483 = vunpack.c.l.b16 %v1451
    %v1484 = vunpack.c.l.b16 %v1452
    %v1485 = vunpack.c.l.b16 %v1453
    %v1486 = vunpack.c.l.b16 %v1454
    %v1487 = vunpack.c.l.b16 %v1455
    %v1488 = vunpack.c.l.b16 %v1456
    %v1489 = vunpack.c.l.b16 %v1457
    %v1490 = vunpack.c.l.b16 %v1458
    %v1491 = vunpack.c.l.b16 %v1459
    %v1492 = vunpack.c.l.b16 %v1460
    %v1493 = vunpack.c.l.b16 %v1461
    %v1494 = vunpack.c.l.b16 %v1462
    %v1495 = vunpack.c.l.b16 %v1463
    %v1496 = vpack.c.b16 %v1481, %v1480
    %v1497 = vpack.c.b16 %v1483, %v1482
    %v1498 = vpack.c.b16 %v1485, %v1484
    %v1499 = vpack.c.b16 %v1487, %v1486
    %v1500 = vpack.c.b16 %v1489, %v1488
    %v1501 = vpack.c.b16 %v1491, %v1490
    %v1502 = vpack.c.b16 %v1493, %v1492
    %v1503 = vpack.c.b16 %v1495, %v1494
    %1512 = vmatprep.subr.bf16.mxu0 0
    %1513 = vmatpush1.bf16.msra.mxu0 %v1503
    %1514 = vmatprep.subr.bf16.mxu0 0
    %1515 = vmatpush1.bf16.msra.mxu0 %v1502
    %1516 = vmatprep.subr.bf16.mxu0 0
    %1517 = vmatpush1.bf16.msra.mxu0 %v1501
    %1518 = vmatprep.subr.bf16.mxu0 0
    %1519 = vmatpush1.bf16.msra.mxu0 %v1500
    %1520 = vmatprep.subr.bf16.mxu0 0
    %1521 = vmatpush1.bf16.msra.mxu0 %v1499
    %1522 = vmatprep.subr.bf16.mxu0 0
    %1523 = vmatpush1.bf16.msra.mxu0 %v1498
    %1524 = vmatprep.subr.bf16.mxu0 0
    %1525 = vmatpush1.bf16.msra.mxu0 %v1497
    %1526 = vmatprep.subr.bf16.mxu0 0
    %1527 = vmatpush1.bf16.msra.mxu0 %v1496
    %1528 = vmatprep.subr.bf16.mxu0 0
    %1529 = vmatpush2.bf16.msra.mxu0 0
    %1530 = vmatprep.subr.bf16.mxu0 0
    %1531 = vmatpush2.bf16.msra.mxu0 0
    %1532 = vmatprep.subr.bf16.mxu0 0
    %1533 = vmatpush2.bf16.msra.mxu0 0
    %1534 = vmatprep.subr.bf16.mxu0 0
    %1535 = vmatpush2.bf16.msra.mxu0 0
    %1536 = vmatprep.subr.bf16.mxu0 0
    %1537 = vmatpush2.bf16.msra.mxu0 0
    %1538 = vmatprep.subr.bf16.mxu0 0
    %1539 = vmatpush2.bf16.msra.mxu0 0
    %1540 = vmatprep.subr.bf16.mxu0 0
    %1541 = vmatpush2.bf16.msra.mxu0 0
    %1542 = vmatprep.subr.bf16.mxu0 0
    %1543 = vmatpush2.bf16.msra.mxu0 0
    %1544 = vmatprep.mubr.bf16.mxu0 0
    %1545 = vmatmul.mubr.bf16.gmra.mxu0 %v81
    %v1546 = vpop.f32.mrf.mxu0
    %v1547 = vadd.f32 0.0, %v1546
    %v1548 = vpop.f32.mrf.mxu0
    %v1549 = vpop.f32.mrf.mxu0
    %v1550 = vadd.f32 0.0, %v1549
    %v1551 = vpop.f32.mrf.mxu0
    %1552 = vmatprep.mubr.bf16.mxu0 0
    %1553 = vmatmul.mubr.bf16.gmra.mxu0 %v82
    %v1554 = vpop.f32.mrf.mxu0
    %v1555 = vadd.f32 0.0, %v1554
    %v1556 = vpop.f32.mrf.mxu0
    %v1557 = vpop.f32.mrf.mxu0
    %v1558 = vadd.f32 0.0, %v1557
    %v1559 = vpop.f32.mrf.mxu0
    %1560 = vdwg.mxu0
    %1561 = vset.pattern.permute.xlu0 7
    %1562 = vperm.xlu0 %1561, %v83
    %v1563 = vpop.permute.xlu0 %1562
    %1565 = vset.pattern.permute.xlu0 7
    %1566 = vperm.xlu0 %1565, %v84
    %v1567 = vpop.permute.xlu0 %1566
    %1569 = vset.pattern.permute.xlu0 7
    %1570 = vperm.xlu0 %1569, %v85
    %v1571 = vpop.permute.xlu0 %1570
    %1573 = vset.pattern.permute.xlu0 7
    %1574 = vperm.xlu0 %1573, %v86
    %v1575 = vpop.permute.xlu0 %1574
    %v1577 = vmul.f32 %v1563, %v1547
    %v1578 = vmul.f32 %v1567, %v1550
    %v1579 = vmul.f32 %v1571, %v1555
    %v1580 = vmul.f32 %v1575, %v1558
    %v1581 = vrot.slane %v83, 7
    %1582 = vrot.lane.b32.xlu0 %v1581, 112
    %v1583 = vpop.permute.xlu0 %1582
    %s1584 = vtos %v1583
    %v1585 = vstv %s1584
    %v1587 = vadd.f32 %v1577, %v1585
    %v1588 = vadd.f32 %v1578, %v1585
    %v1589 = vadd.f32 %v1579, %v1585
    %v1590 = vadd.f32 %v1580, %v1585
    %v1591 = vmul.f32 %v1587, 0.5
    %v1592 = vmul.f32 %v1588, 0.5
    %v1593 = vmul.f32 %v1589, 0.5
    %v1594 = vmul.f32 %v1590, 0.5
    %v1595 = vmul.f32 %v1587, 0.044715
    %v1596 = vmul.f32 %v1588, 0.044715
    %v1597 = vmul.f32 %v1589, 0.044715
    %v1598 = vmul.f32 %v1590, 0.044715
    %v1599 = vmul.f32 %v1595, %v1587
    %v1600 = vmul.f32 %v1596, %v1588
    %v1601 = vmul.f32 %v1597, %v1589
    %v1602 = vmul.f32 %v1598, %v1590
    %v1603 = vmul.f32 %v1599, %v1587
    %v1604 = vmul.f32 %v1600, %v1588
    %v1605 = vmul.f32 %v1601, %v1589
    %v1606 = vmul.f32 %v1602, %v1590
    %v1607 = vadd.f32 %v1587, %v1603
    %v1608 = vadd.f32 %v1588, %v1604
    %v1609 = vadd.f32 %v1589, %v1605
    %v1610 = vadd.f32 %v1590, %v1606
    %v1611 = vmul.f32 %v1607, 0.7978846
    %v1612 = vmul.f32 %v1608, 0.7978846
    %v1613 = vmul.f32 %v1609, 0.7978846
    %v1614 = vmul.f32 %v1610, 0.7978846
    %v1615 = vtanh.pop %v1611
    %v1616 = vtanh.pop %v1612
    %v1617 = vtanh.pop %v1613
    %v1618 = vtanh.pop %v1614
    %v1619 = vadd.f32 %v1615, 1.0
    %v1620 = vadd.f32 %v1616, 1.0
    %v1621 = vadd.f32 %v1617, 1.0
    %v1622 = vadd.f32 %v1618, 1.0
    %v1623 = vmul.f32 %v1591, %v1619
    %v1624 = vmul.f32 %v1592, %v1620
    %v1625 = vmul.f32 %v1593, %v1621
    %v1626 = vmul.f32 %v1594, %v1622
    %v1627 = vadd.f32 %v1623, %v1624
    %v1628 = vrot.slane %v1627, 4
    %v1629 = vadd.f32 %v1627, %v1628
    %v1630 = vrot.slane %v1629, 2
    %v1631 = vadd.f32 %v1629, %v1630
    %v1632 = vrot.slane %v1631, 1
    %v1633 = vadd.f32 %v1631, %v1632
    %v1634 = vadd.f32 %v1625, %v1626
    %v1635 = vrot.slane %v1634, 4
    %v1636 = vadd.f32 %v1634, %v1635
    %v1637 = vrot.slane %v1636, 2
    %v1638 = vadd.f32 %v1636, %v1637
    %v1639 = vrot.slane %v1638, 1
    %v1640 = vadd.f32 %v1638, %v1639
    %v1643 = vrot.slane %v469, 7
    %v1644 = vrot.slane %v476, 7
    %v1649 = vrot.slane %v663, 6
    %v1650 = vrot.slane %v670, 6
    %v1655 = vrot.slane %v857, 5
    %v1656 = vrot.slane %v864, 5
    %v1661 = vrot.slane %v1051, 4
    %v1662 = vrot.slane %v1058, 4
    %v1667 = vrot.slane %v1245, 3
    %v1668 = vrot.slane %v1252, 3
    %v1673 = vrot.slane %v1439, 2
    %v1674 = vrot.slane %v1446, 2
    %v1679 = vrot.slane %v1633, 1
    %v1680 = vrot.slane %v1640, 1
    %vm1683 = vcmask 1040384
    %v1684 = vsel %vm1683, %v275, %v1643
    %v1685 = vsel %vm1683, %v282, %v1644
    %vm1686 = vcmask 1041408
    %v1687 = vsel %vm1686, %v1684, %v1649
    %v1688 = vsel %vm1686, %v1685, %v1650
    %vm1689 = vcmask 1042432
    %v1690 = vsel %vm1689, %v1687, %v1655
    %v1691 = vsel %vm1689, %v1688, %v1656
    %vm1692 = vcmask 1043456
    %v1693 = vsel %vm1692, %v1690, %v1661
    %v1694 = vsel %vm1692, %v1691, %v1662
    %vm1695 = vcmask 1044480
    %v1696 = vsel %vm1695, %v1693, %v1667
    %v1697 = vsel %vm1695, %v1694, %v1668
    %vm1698 = vcmask 1045504
    %v1699 = vsel %vm1698, %v1696, %v1673
    %v1700 = vsel %vm1698, %v1697, %v1674
    %vm1701 = vcmask 1046528
    %v1702 = vsel %vm1701, %v1699, %v1679
    %v1703 = vsel %vm1701, %v1700, %v1680
    %1704 = vrot.lane.b32.xlu0 %v83, 120
    %v1705 = vpop.permute.xlu0 %1704
    %vm1706 = vcmask 64512
    %v1707 = vsel %vm1706, %v1705, 0
    %1709 = vmatprep.subr.mxu0 0.0
    %1710 = vmatpush1.msra.mxu0 0.0
    %1711 = vmatprep.subr.mxu0 0.0
    %1712 = vmatpush1.msra.mxu0 0.0
    %1713 = vmatprep.subr.mxu0 0.0
    %1714 = vmatpush1.msra.mxu0 0.0
    %1715 = vmatprep.subr.mxu0 0.0
    %1716 = vmatpush1.msra.mxu0 0.0
    %1717 = vmatprep.subr.mxu0 0.0
    %1718 = vmatpush1.msra.mxu0 0.0
    %1719 = vmatprep.subr.mxu0 0.0
    %1720 = vmatpush1.msra.mxu0 0.0
    %1721 = vmatprep.subr.mxu0 0.0
    %1722 = vmatpush1.msra.mxu0 0.0
    %1723 = vmatprep.subr.mxu0 0.0
    %1724 = vmatpush1.msra.mxu0 0.0
    %1725 = vmatprep.subr.mxu0 0.0
    %1726 = vmatpush1.msra.mxu0 0.0
    %1727 = vmatprep.subr.mxu0 0.0
    %1728 = vmatpush1.msra.mxu0 0.0
    %1729 = vmatprep.subr.mxu0 0.0
    %1730 = vmatpush1.msra.mxu0 0.0
    %1731 = vmatprep.subr.mxu0 0.0
    %1732 = vmatpush1.msra.mxu0 0.0
    %1733 = vmatprep.subr.mxu0 0.0
    %1734 = vmatpush1.msra.mxu0 0.0
    %1735 = vmatprep.subr.mxu0 0.0
    %1736 = vmatpush1.msra.mxu0 0.0
    %1737 = vmatprep.subr.mxu0 0.0
    %1738 = vmatpush1.msra.mxu0 0.0
    %1739 = vmatprep.subr.mxu0 %v1703
    %1740 = vmatpush1.msra.mxu0 %v1702
    %1741 = vmatprep.subr.mxu0 0.0
    %1742 = vmatpush2.msra.mxu0 0.0
    %1743 = vmatprep.subr.mxu0 0.0
    %1744 = vmatpush2.msra.mxu0 0.0
    %1745 = vmatprep.subr.mxu0 0.0
    %1746 = vmatpush2.msra.mxu0 0.0
    %1747 = vmatprep.subr.mxu0 0.0
    %1748 = vmatpush2.msra.mxu0 0.0
    %1749 = vmatprep.subr.mxu0 0.0
    %1750 = vmatpush2.msra.mxu0 0.0
    %1751 = vmatprep.subr.mxu0 0.0
    %1752 = vmatpush2.msra.mxu0 0.0
    %1753 = vmatprep.subr.mxu0 0.0
    %1754 = vmatpush2.msra.mxu0 0.0
    %1755 = vmatprep.subr.mxu0 0.0
    %1756 = vmatpush2.msra.mxu0 0.0
    %1757 = vmatprep.subr.mxu0 0.0
    %1758 = vmatpush2.msra.mxu0 0.0
    %1759 = vmatprep.subr.mxu0 0.0
    %1760 = vmatpush2.msra.mxu0 0.0
    %1761 = vmatprep.subr.mxu0 0.0
    %1762 = vmatpush2.msra.mxu0 0.0
    %1763 = vmatprep.subr.mxu0 0.0
    %1764 = vmatpush2.msra.mxu0 0.0
    %1765 = vmatprep.subr.mxu0 0.0
    %1766 = vmatpush2.msra.mxu0 0.0
    %1767 = vmatprep.subr.mxu0 0.0
    %1768 = vmatpush2.msra.mxu0 0.0
    %1769 = vmatprep.subr.mxu0 0.0
    %1770 = vmatpush2.msra.mxu0 0.0
    %1771 = vmatprep.subr.mxu0 0.0
    %1772 = vmatpush2.msra.mxu0 0.0
    %1773 = vmatprep.mubr.f32.mxu0 0.0
    %1774 = vmatmul.mubr.f32.gmra.mxu0 %v1707
    %v1775 = vpop.f32.mrf.mxu0
    %v1776 = vadd.f32 0.0, %v1775
    %v1777 = vpop.f32.mrf.mxu0
    %v1778 = vadd.f32 0.0, %v1777
    %1779 = vdwg.mxu0
    %v1780 = vrot.slane %v1776, 4
    %v1781 = vmax.f32 %v1776, %v1780
    %v1782 = vrot.slane %v1781, 2
    %v1783 = vmax.f32 %v1781, %v1782
    %v1784 = vrot.slane %v1783, 1
    %v1785 = vmax.f32 %v1783, %v1784
    %v1786 = vrot.slane %v1778, 4
    %v1787 = vmax.f32 %v1778, %v1786
    %v1788 = vrot.slane %v1787, 2
    %v1789 = vmax.f32 %v1787, %v1788
    %v1790 = vrot.slane %v1789, 1
    %v1791 = vmax.f32 %v1789, %v1790
    %v1792 = vsub.f32 %v1776, %v1785
    %v1793 = vsub.f32 %v1778, %v1791
    %v1794 = vmul.f32 %v1792, 1.442695
    %v1795 = vpow.pop %v1794
    %v1796 = vmul.f32 %v1793, 1.442695
    %v1797 = vpow.pop %v1796
    %v1798 = vrot.slane %v1795, 4
    %v1799 = vadd.f32 %v1795, %v1798
    %v1800 = vrot.slane %v1799, 2
    %v1801 = vadd.f32 %v1799, %v1800
    %v1802 = vrot.slane %v1801, 1
    %v1803 = vadd.f32 %v1801, %v1802
    %v1804 = vrot.slane %v1797, 4
    %v1805 = vadd.f32 %v1797, %v1804
    %v1806 = vrot.slane %v1805, 2
    %v1807 = vadd.f32 %v1805, %v1806
    %v1808 = vrot.slane %v1807, 1
    %v1809 = vadd.f32 %v1807, %v1808
    %v1810 = vrcp.pop %v1803
    %v1811 = vrcp.pop %v1809
    %v1812 = vmul.f32 %v1795, %v1810
    %v1813 = vmul.f32 %v1797, %v1811
    %v1814 = vlaneseq
    %v1815 = vshrl.u32 %v1814, 7
    %v1816 = vsub.s32 0, %v1815
    %v1817 = vrot.slane %v1812, %v1816
    %v1818 = vmul.f32 %v265, %v1817
    %v1819 = vmul.f32 %v266, %v1817
    %v1820 = vlaneseq
    %v1821 = vshrl.u32 %v1820, 7
    %v1822 = vsub.s32 0, %v1821
    %v1823 = vrot.slane %v1813, %v1822
    %v1824 = vmul.f32 %v267, %v1823
    %v1825 = vmul.f32 %v268, %v1823
    %v1826 = vlaneseq
    %v1827 = vshrl.u32 %v1826, 7
    %v1828 = vsub.s32 1, %v1827
    %v1829 = vrot.slane %v1812, %v1828
    %v1830 = vmul.f32 %v459, %v1829
    %v1831 = vmul.f32 %v460, %v1829
    %v1832 = vlaneseq
    %v1833 = vshrl.u32 %v1832, 7
    %v1834 = vsub.s32 1, %v1833
    %v1835 = vrot.slane %v1813, %v1834
    %v1836 = vmul.f32 %v461, %v1835
    %v1837 = vmul.f32 %v462, %v1835
    %v1838 = vlaneseq
    %v1839 = vshrl.u32 %v1838, 7
    %v1840 = vsub.s32 2, %v1839
    %v1841 = vrot.slane %v1812, %v1840
    %v1842 = vmul.f32 %v653, %v1841
    %v1843 = vmul.f32 %v654, %v1841
    %v1844 = vlaneseq
    %v1845 = vshrl.u32 %v1844, 7
    %v1846 = vsub.s32 2, %v1845
    %v1847 = vrot.slane %v1813, %v1846
    %v1848 = vmul.f32 %v655, %v1847
    %v1849 = vmul.f32 %v656, %v1847
    %v1850 = vlaneseq
    %v1851 = vshrl.u32 %v1850, 7
    %v1852 = vsub.s32 3, %v1851
    %v1853 = vrot.slane %v1812, %v1852
    %v1854 = vmul.f32 %v847, %v1853
    %v1855 = vmul.f32 %v848, %v1853
    %v1856 = vlaneseq
    %v1857 = vshrl.u32 %v1856, 7
    %v1858 = vsub.s32 3, %v1857
    %v1859 = vrot.slane %v1813, %v1858
    %v1860 = vmul.f32 %v849, %v1859
    %v1861 = vmul.f32 %v850, %v1859
    %v1862 = vlaneseq
    %v1863 = vshrl.u32 %v1862, 7
    %v1864 = vsub.s32 4, %v1863
    %v1865 = vrot.slane %v1812, %v1864
    %v1866 = vmul.f32 %v1041, %v1865
    %v1867 = vmul.f32 %v1042, %v1865
    %v1868 = vlaneseq
    %v1869 = vshrl.u32 %v1868, 7
    %v1870 = vsub.s32 4, %v1869
    %v1871 = vrot.slane %v1813, %v1870
    %v1872 = vmul.f32 %v1043, %v1871
    %v1873 = vmul.f32 %v1044, %v1871
    %v1874 = vlaneseq
    %v1875 = vshrl.u32 %v1874, 7
    %v1876 = vsub.s32 5, %v1875
    %v1877 = vrot.slane %v1812, %v1876
    %v1878 = vmul.f32 %v1235, %v1877
    %v1879 = vmul.f32 %v1236, %v1877
    %v1880 = vlaneseq
    %v1881 = vshrl.u32 %v1880, 7
    %v1882 = vsub.s32 5, %v1881
    %v1883 = vrot.slane %v1813, %v1882
    %v1884 = vmul.f32 %v1237, %v1883
    %v1885 = vmul.f32 %v1238, %v1883
    %v1886 = vlaneseq
    %v1887 = vshrl.u32 %v1886, 7
    %v1888 = vsub.s32 6, %v1887
    %v1889 = vrot.slane %v1812, %v1888
    %v1890 = vmul.f32 %v1429, %v1889
    %v1891 = vmul.f32 %v1430, %v1889
    %v1892 = vlaneseq
    %v1893 = vshrl.u32 %v1892, 7
    %v1894 = vsub.s32 6, %v1893
    %v1895 = vrot.slane %v1813, %v1894
    %v1896 = vmul.f32 %v1431, %v1895
    %v1897 = vmul.f32 %v1432, %v1895
    %v1898 = vlaneseq
    %v1899 = vshrl.u32 %v1898, 7
    %v1900 = vsub.s32 7, %v1899
    %v1901 = vrot.slane %v1812, %v1900
    %v1902 = vmul.f32 %v1623, %v1901
    %v1903 = vmul.f32 %v1624, %v1901
    %v1904 = vlaneseq
    %v1905 = vshrl.u32 %v1904, 7
    %v1906 = vsub.s32 7, %v1905
    %v1907 = vrot.slane %v1813, %v1906
    %v1908 = vmul.f32 %v1625, %v1907
    %v1909 = vmul.f32 %v1626, %v1907
    %v1910 = vld [vmem:[%s2] sm:$0xf]
    %1911 = vset.pattern.permute.xlu0 17
    %1912 = vperm.xlu0 %1911, %v83
    %v1913 = vpop.permute.xlu0 %1912
    %1915 = vmatprep.subr.mxu0 %v1909
    %1916 = vmatpush1.msra.mxu0 %v1903
    %1917 = vmatprep.subr.mxu0 %v1908
    %1918 = vmatpush1.msra.mxu0 %v1902
    %1919 = vmatprep.subr.mxu0 %v1897
    %1920 = vmatpush1.msra.mxu0 %v1891
    %1921 = vmatprep.subr.mxu0 %v1896
    %1922 = vmatpush1.msra.mxu0 %v1890
    %1923 = vmatprep.subr.mxu0 %v1885
    %1924 = vmatpush1.msra.mxu0 %v1879
    %1925 = vmatprep.subr.mxu0 %v1884
    %1926 = vmatpush1.msra.mxu0 %v1878
    %1927 = vmatprep.subr.mxu0 %v1873
    %1928 = vmatpush1.msra.mxu0 %v1867
    %1929 = vmatprep.subr.mxu0 %v1872
    %1930 = vmatpush1.msra.mxu0 %v1866
    %1931 = vmatprep.subr.mxu0 %v1861
    %1932 = vmatpush1.msra.mxu0 %v1855
    %1933 = vmatprep.subr.mxu0 %v1860
    %1934 = vmatpush1.msra.mxu0 %v1854
    %1935 = vmatprep.subr.mxu0 %v1849
    %1936 = vmatpush1.msra.mxu0 %v1843
    %1937 = vmatprep.subr.mxu0 %v1848
    %1938 = vmatpush1.msra.mxu0 %v1842
    %1939 = vmatprep.subr.mxu0 %v1837
    %1940 = vmatpush1.msra.mxu0 %v1831
    %1941 = vmatprep.subr.mxu0 %v1836
    %1942 = vmatpush1.msra.mxu0 %v1830
    %1943 = vmatprep.subr.mxu0 %v1825
    %1944 = vmatpush1.msra.mxu0 %v1819
    %1945 = vmatprep.subr.mxu0 %v1824
    %1946 = vmatpush1.msra.mxu0 %v1818
    %1947 = vmatprep.subr.mxu0 0.0
    %1948 = vmatpush2.msra.mxu0 0.0
    %1949 = vmatprep.subr.mxu0 0.0
    %1950 = vmatpush2.msra.mxu0 0.0
    %1951 = vmatprep.subr.mxu0 0.0
    %1952 = vmatpush2.msra.mxu0 0.0
    %1953 = vmatprep.subr.mxu0 0.0
    %1954 = vmatpush2.msra.mxu0 0.0
    %1955 = vmatprep.subr.mxu0 0.0
    %1956 = vmatpush2.msra.mxu0 0.0
    %1957 = vmatprep.subr.mxu0 0.0
    %1958 = vmatpush2.msra.mxu0 0.0
    %1959 = vmatprep.subr.mxu0 0.0
    %1960 = vmatpush2.msra.mxu0 0.0
    %1961 = vmatprep.subr.mxu0 0.0
    %1962 = vmatpush2.msra.mxu0 0.0
    %1963 = vmatprep.subr.mxu0 0.0
    %1964 = vmatpush2.msra.mxu0 0.0
    %1965 = vmatprep.subr.mxu0 0.0
    %1966 = vmatpush2.msra.mxu0 0.0
    %1967 = vmatprep.subr.mxu0 0.0
    %1968 = vmatpush2.msra.mxu0 0.0
    %1969 = vmatprep.subr.mxu0 0.0
    %1970 = vmatpush2.msra.mxu0 0.0
    %1971 = vmatprep.subr.mxu0 0.0
    %1972 = vmatpush2.msra.mxu0 0.0
    %1973 = vmatprep.subr.mxu0 0.0
    %1974 = vmatpush2.msra.mxu0 0.0
    %1975 = vmatprep.subr.mxu0 0.0
    %1976 = vmatpush2.msra.mxu0 0.0
    %1977 = vmatprep.subr.mxu0 0.0
    %1978 = vmatpush2.msra.mxu0 0.0
    %1979 = vmatprep.mubr.f32.mxu0 0.0
    %1980 = vmatmul.mubr.f32.gmra.mxu0 %v1910
    %v1981 = vpop.f32.mrf.mxu0
    %v1982 = vadd.f32 %v1913, %v1981
    %v1983 = vpop.f32.mrf.mxu0
    %v1984 = vadd.f32 %v1913, %v1983
    %1985 = vdwg.mxu0
    %v1986 = vmul.f32 %v1982, 0.5
    %v1987 = vmul.f32 %v1984, 0.5
    %v1988 = vmul.f32 %v1982, 0.044715
    %v1989 = vmul.f32 %v1984, 0.044715
    %v1990 = vmul.f32 %v1988, %v1982
    %v1991 = vmul.f32 %v1989, %v1984
    %v1992 = vmul.f32 %v1990, %v1982
    %v1993 = vmul.f32 %v1991, %v1984
    %v1994 = vadd.f32 %v1982, %v1992
    %v1995 = vadd.f32 %v1984, %v1993
    %v1996 = vmul.f32 %v1994, 0.7978846
    %v1997 = vmul.f32 %v1995, 0.7978846
    %v1998 = vtanh.pop %v1996
    %v1999 = vtanh.pop %v1997
    %v2000 = vadd.f32 %v1998, 1.0
    %v2001 = vadd.f32 %v1999, 1.0
    %v2002 = vmul.f32 %v1986, %v2000
    %v2003 = vmul.f32 %v1987, %v2001
    %v2004 = vld [vmem:[#allocation7] sm:$0xf]
    %v2005 = vld [vmem:[#allocation7 + $0x4] sm:$0xf]
    %v2006 = vld [vmem:[#allocation7 + $0x8] sm:$0xf]
    %v2007 = vld [vmem:[#allocation7 + $0xc] sm:$0xf]
    %v2008 = vmul.f32 %v2002, %v2004
    %v2009 = vmul.f32 %v2002, %v2005
    %v2010 = vmul.f32 %v2002, %v2006
    %v2011 = vmul.f32 %v2002, %v2007
    %v2012 = vmul.f32 %v2003, %v2004
    %v2013 = vmul.f32 %v2003, %v2005
    %v2014 = vmul.f32 %v2003, %v2006
    %v2015 = vmul.f32 %v2003, %v2007
    %v2016 = vsel %vm1692, %v2008, 0.0
    %2017 = vadd.xlane.f32.xlu0 %v2016
    %v2018 = vpop.xlane.xlu0 %2017
    %v2019 = vsel %vm1692, %v2009, 0.0
    %2020 = vadd.xlane.f32.xlu0 %v2019
    %v2021 = vpop.xlane.xlu0 %2020
    %v2022 = vsel %vm1692, %v2010, 0.0
    %2023 = vadd.xlane.f32.xlu0 %v2022
    %v2024 = vpop.xlane.xlu0 %2023
    %v2025 = vsel %vm1692, %v2011, 0.0
    %2026 = vadd.xlane.f32.xlu0 %v2025
    %v2027 = vpop.xlane.xlu0 %2026
    %v2028 = vsel %vm1692, %v2012, 0.0
    %2029 = vadd.xlane.f32.xlu0 %v2028
    %v2030 = vpop.xlane.xlu0 %2029
    %v2031 = vsel %vm1692, %v2013, 0.0
    %2032 = vadd.xlane.f32.xlu0 %v2031
    %v2033 = vpop.xlane.xlu0 %2032
    %v2034 = vsel %vm1692, %v2014, 0.0
    %2035 = vadd.xlane.f32.xlu0 %v2034
    %v2036 = vpop.xlane.xlu0 %2035
    %v2037 = vsel %vm1692, %v2015, 0.0
    %2038 = vadd.xlane.f32.xlu0 %v2037
    %v2039 = vpop.xlane.xlu0 %2038
    %v2048 = vlaneseq
    %v2049 = vand.u32 %v2048, 127
    %v2050 = vlaneseq
    %v2051 = vshrl.u32 %v2050, 7
    %v2052 = vsub.s32 %v2049, %v2051
    %v2053 = vrot.slane %v2018, %v2052
    %v2054 = vlaneseq
    %v2055 = vshrl.u32 %v2054, 7
    %v2056 = vsub.s32 %v2049, %v2055
    %v2057 = vrot.slane %v2021, %v2056
    %v2058 = vlaneseq
    %v2059 = vshrl.u32 %v2058, 7
    %v2060 = vsub.s32 %v2049, %v2059
    %v2061 = vrot.slane %v2024, %v2060
    %v2062 = vlaneseq
    %v2063 = vshrl.u32 %v2062, 7
    %v2064 = vsub.s32 %v2049, %v2063
    %v2065 = vrot.slane %v2027, %v2064
    %v2066 = vlaneseq
    %v2067 = vshrl.u32 %v2066, 7
    %v2068 = vsub.s32 %v2049, %v2067
    %v2069 = vrot.slane %v2030, %v2068
    %v2070 = vlaneseq
    %v2071 = vshrl.u32 %v2070, 7
    %v2072 = vsub.s32 %v2049, %v2071
    %v2073 = vrot.slane %v2033, %v2072
    %v2074 = vlaneseq
    %v2075 = vshrl.u32 %v2074, 7
    %v2076 = vsub.s32 %v2049, %v2075
    %v2077 = vrot.slane %v2036, %v2076
    %v2078 = vlaneseq
    %v2079 = vshrl.u32 %v2078, 7
    %v2080 = vsub.s32 %v2049, %v2079
    %v2081 = vrot.slane %v2039, %v2080
    %vm2082 = vcmask 1041409
    %v2083 = vsel %vm2082, %v2057, %v2053
    %vm2084 = vcmask 1042434
    %v2085 = vsel %vm2084, %v2061, %v2083
    %vm2086 = vcmask 1043459
    %v2087 = vsel %vm2086, %v2065, %v2085
    %v2088 = vsel %vm2082, %v2073, %v2069
    %v2089 = vsel %vm2084, %v2077, %v2088
    %v2090 = vsel %vm2086, %v2081, %v2089
    %vm2093 = vcmask 27648
    %v2094 = vsel %vm2093, %v2087, 0.0
    %2095 = vadd.xlane.f32.xlu0 %v2094
    %v2096 = vpop.xlane.xlu0 %2095
    %v2097 = vsel %vm2093, %v2090, 0.0
    %2098 = vadd.xlane.f32.xlu0 %v2097
    %v2099 = vpop.xlane.xlu0 %2098
    %v2100 = vlaneseq
    %v2101 = vshrl.u32 %v2100, 7
    %v2102 = vsub.s32 0, %v2101
    %v2103 = vrot.slane %v83, %v2102
    %s2106 = sor.u32 256, 24
    %2107 = vbcast.lane.b32.xlu0 %v2103, %s2106
    %v2108 = vpop.permute.xlu0 %2107
    %v2110 = vadd.f32 %v2096, %v2108
    %v2111 = vadd.f32 %v2099, %v2108
    %2114 = vset.pattern.permute.xlu0 0
    %2115 = vperm.xlu0 %2114, %v2110
    %v2116 = vpop.permute.xlu0 %2115
    %2117 = vset.pattern.permute.xlu0 0
    %2118 = vperm.xlu0 %2117, %v2111
    %v2119 = vpop.permute.xlu0 %2118
    %v2120 = vlaneseq
    %v2121 = vshrl.u32 %v2120, 7
    %v2122 = vsub.s32 %v2049, %v2121
    %v2123 = vrot.slane %v2116, %v2122
    %v2124 = vlaneseq
    %v2125 = vshrl.u32 %v2124, 7
    %v2126 = vsub.s32 %v2049, %v2125
    %v2127 = vrot.slane %v2119, %v2126
    %v2128 = vsel %vm2082, %v2127, %v2123
    %vm2130 = vcmask 25600
    %2131 = vst.msk [vmem:[#allocation10] sm:$0x3] %vm2130, %v2128
    // Predicated region
    $region38: #{lmda_forward.1} parent=1 // pred_check
      _
    $region39: #{lmda_forward.1} parent=1 // pred_check_branch
      %2133 = sbr.rel (0) target = $region41
    $region40: #{lmda_forward.1} parent=1 // pred_region
      %s2135 = ssub.s32 32, 32
      %2136 = vsyncadd [#allocation4], %s2135
      %s2138 = sshll.u32 [#allocation10], 4
      %s2139 = int_to_ptr.vmem [resolvable:$true] %s2138
      %2141 = dma.vmem_to_hbm [thread:$0]  %s2139, 32, %s5, [#allocation4]
    $region41: #{lmda_forward.1} parent=1 // pred_fallthru
      _
    // Predicated region
    $region42: #{lmda_forward.1} parent=1 // pred_check
      _
    $region43: #{lmda_forward.1} parent=1 // pred_check_branch
      %2143 = sbr.rel (0) target = $region45
    $region44: #{lmda_forward.1} parent=1 // pred_region
      %2144 = dma.done [#allocation4], 32
    $region45: #{lmda_forward.1} parent=1 // pred_fallthru
      _
    %2145 = vsyncpa [#allocation3], 1
    %2146 = vsyncpa [#allocation6], 1
    %2147 = vsyncpa [#allocation9], 1
    %2148 = vsyncpa [#allocation4], 1

</llo_original>
